<compile_context>
chip_gen: v6e
topology: v6e:2x2x1
jax: 0.10.0
libtpu: 0.0.40
codegen_flags: <defaults>
</compile_context>

<pallas_src>
from functools import partial

import jax
import jax.numpy as jnp
from jax.experimental import pallas as pl
from jax.experimental.pallas import tpu as pltpu


# ----------------------------- in-kernel helpers -----------------------------

def _row_up_halo(y):
    # y: (TH+2, W, C) window whose row l holds input row clamp(r0-1+l).
    # Returns rows m = 2*r0-1 .. 2*r0+2*TH of the 2x row-upsampled image
    # (2*TH+2 rows, image-boundary clamping inherited from the window), i.e.
    # exactly the halo'd window the next 2x stage needs.
    a, b = y[:-1], y[1:]
    odd = 0.75 * a + 0.25 * b           # rows 2g+1, g = r0-1+l
    even = 0.25 * a + 0.75 * b          # rows 2(g+1)
    n, w, c = odd.shape
    return jnp.stack([odd, even], axis=1).reshape(2 * n, w, c)


def _row_up_final(z):
    # z: (2*TH+2, W, C) holding rows m = 2*r0-1 .. 2*r0+2*TH (clamped).
    # Returns this strip's 4*TH output rows p = 4*r0 .. 4*r0+4*TH-1.
    prev_, cur, next_ = z[:-2], z[1:-1], z[2:]
    even = 0.25 * prev_ + 0.75 * cur
    odd = 0.75 * cur + 0.25 * next_
    n, w, c = even.shape
    return jnp.stack([even, odd], axis=1).reshape(2 * n, w, c)


def _col_up_first(z):
    # z: (R, W, C) -> column parities of the 2W-wide result:
    #   A[:, w] = out[:, 2w]   = 0.25*z[:, clamp(w-1)] + 0.75*z[:, w]
    #   B[:, w] = out[:, 2w+1] = 0.75*z[:, w] + 0.25*z[:, clamp(w+1)]
    left = jnp.concatenate([z[:, :1], z[:, :-1]], axis=1)
    right = jnp.concatenate([z[:, 1:], z[:, -1:]], axis=1)
    return 0.25 * left + 0.75 * z, 0.75 * z + 0.25 * right


def _col_up_second(a, b):
    # (a, b) are the column parities of the 2W-wide intermediate u
    # (a = even cols, b = odd cols).  Output column 4w+k of the 4W result:
    #   P0 = 0.25*u[clamp(2w-1)] + 0.75*u[2w]
    #   P1 = 0.75*u[2w]   + 0.25*u[2w+1]
    #   P2 = 0.25*u[2w]   + 0.75*u[2w+1]
    #   P3 = 0.75*u[2w+1] + 0.25*u[clamp(2w+2)]
    b_prev = jnp.concatenate([a[:, :1], b[:, :-1]], axis=1)   # u[clamp(2w-1)]
    a_next = jnp.concatenate([a[:, 1:], b[:, -1:]], axis=1)   # u[clamp(2w+2)]
    p0 = 0.25 * b_prev + 0.75 * a
    p1 = 0.75 * a + 0.25 * b
    p2 = 0.25 * a + 0.75 * b
    p3 = 0.75 * b + 0.25 * a_next
    return p0, p1, p2, p3


# --------------------------------- kernel ------------------------------------

def _final_upsample_x4_kernel(x_top, x_main, x_bot, w1_ref, w2_ref,
                              g_ref, b_ref, o_ref):
    _, th, wdim, cdim = x_main.shape

    # Clamped input-row window: rows clamp(r0-1) .. clamp(r0+TH) -> (TH+2, W, C)
    xw = jnp.concatenate([x_top[0], x_main[0], x_bot[0]], axis=0)

    # linear1 then linear2 at input resolution (exact: bias-free linears commute
    # with the channel-pointwise, spatially-linear bilinear upsampling).
    n_pix = (th + 2) * wdim
    h = jnp.dot(xw.reshape(n_pix, cdim).astype(jnp.float32), w1_ref[...],
                preferred_element_type=jnp.float32)
    h = jnp.dot(h, w2_ref[...], preferred_element_type=jnp.float32)
    y = h.reshape(th + 2, wdim, cdim)

    # First 2x: rows (keeps a 1-row halo at 2x resolution), then columns
    # (kept parity-separated: a = even output cols, b = odd output cols).
    z = _row_up_halo(y)                       # (2*TH+2, W, C)
    a, b = _col_up_first(z)                   # each (2*TH+2, W, C)

    # Second 2x: rows (drops the halo -> exactly this strip's 4*TH rows) ...
    a4 = _row_up_final(a)                     # (4*TH, W, C)
    b4 = _row_up_final(b)
    # ... then columns, as the four final column-parity planes.
    p0, p1, p2, p3 = _col_up_second(a4, b4)

    # Single fused LayerNorm over channels for all four parity planes.
    s = jnp.stack([p0, p1, p2, p3], axis=0)   # (4, 4*TH, W, C)
    mu = jnp.mean(s, axis=-1, keepdims=True)
    var = jnp.mean(jnp.square(s - mu), axis=-1, keepdims=True)
    s = (s - mu) * jax.lax.rsqrt(var + 1e-5) * g_ref[...] + b_ref[...]

    # Lane-dense interleaved store: lane k*C + c of column-group w is output
    # column 4*w + k, so (B, 4H, W, 4C) reshapes for free to (B, 4H, 4W, C).
    out = jnp.concatenate([s[0], s[1], s[2], s[3]], axis=-1)  # (4*TH, W, 4*C)
    o_ref[0] = out.astype(o_ref.dtype)


# --------------------------------- wrapper -----------------------------------

def _pick_block_rows(batch, h, w, c, budget_bytes=6 << 20):
    """Largest row-strip (in input rows) whose per-strip working set fits the
    budget; prefer >=2 strips when the batch alone can't feed both v7x cores."""
    per_row = 200 * w * c * 4                      # ~f32 temporaries per row
    valid = [t for t in range(1, h + 1)
             if h % t == 0 and (t == h or (4 * t) % 8 == 0)]
    fitting = [t for t in valid if t * per_row <= budget_bytes]
    if not fitting:
        return min(valid)
    th = max(fitting)
    if th == h and batch < 2:
        smaller = [t for t in fitting if t < h]
        if smaller:
            th = max(smaller)
    return th


@partial(jax.jit, static_argnames=("block_rows",))
def final_upsample_x4(x, w1, w2, gamma, beta, block_rows=None):
    """x: (B, H, W, C); w1, w2: (C, C) (== transposed torch Linear weights);
    gamma, beta: (C,).  Returns (B, 4H, 4W, C) in x.dtype."""
    batch, h, w, c = x.shape
    th = _pick_block_rows(batch, h, w, c) if block_rows is None else int(block_rows)
    if h % th != 0 or (th != h and (4 * th) % 8 != 0):
        raise ValueError(f"block_rows={th} must divide H={h} and be even.")
    ns = h // th
    out_dtype = x.dtype

    # Rough per-strip VMEM need (double-buffered blocks + f32 temporaries).
    est = (200 * th * w * c * 4
           + 2 * 4 * th * w * 4 * c * jnp.dtype(out_dtype).itemsize
           + 2 * (th + 2) * w * c * x.dtype.itemsize)
    vmem_limit = int(min(max(2 * est, 16 << 20), 48 << 20))

    out = pl.pallas_call(
        _final_upsample_x4_kernel,
        out_shape=jax.ShapeDtypeStruct((batch, 4 * h, w, 4 * c), out_dtype),
        grid=(batch, ns),
        in_specs=[
            # clamped halo row above the strip: x[b, max(r*th - 1, 0)]
            pl.BlockSpec((1, 1, w, c),
                         lambda bi, r: (bi, jnp.maximum(r * th - 1, 0), 0, 0)),
            # the strip itself: x[b, r*th : (r+1)*th]
            pl.BlockSpec((1, th, w, c), lambda bi, r: (bi, r, 0, 0)),
            # clamped halo row below: x[b, min((r+1)*th, H-1)]
            pl.BlockSpec((1, 1, w, c),
                         lambda bi, r: (bi, jnp.minimum((r + 1) * th, h - 1), 0, 0)),
            pl.BlockSpec((c, c), lambda bi, r: (0, 0)),
            pl.BlockSpec((c, c), lambda bi, r: (0, 0)),
            pl.BlockSpec((1, c), lambda bi, r: (0, 0)),
            pl.BlockSpec((1, c), lambda bi, r: (0, 0)),
        ],
        out_specs=pl.BlockSpec((1, 4 * th, w, 4 * c), lambda bi, r: (bi, r, 0, 0)),
        compiler_params=pltpu.CompilerParams(
            dimension_semantics=("parallel", "parallel"),
            vmem_limit_bytes=vmem_limit),
    )(x, x, x, w1, w2, gamma.reshape(1, c), beta.reshape(1, c))

    # (B, 4H, W, 4C) -> (B, 4H, 4W, C): same row-major layout, free reshape.
    return out.reshape(batch, 4 * h, 4 * w, c)


# ------------------------------ pure-JAX reference ---------------------------

def _bilinear_up2x_ref(y):
    # NHWC bilinear 2x, align_corners=False (matches F.interpolate).
    _, h, w, _ = y.shape

    def taps(n):
        d = jnp.arange(2 * n, dtype=jnp.float32)
        s = jnp.maximum((d + 0.5) * 0.5 - 0.5, 0.0)
        lo = jnp.floor(s).astype(jnp.int32)
        fr = s - lo.astype(jnp.float32)
        hi = jnp.minimum(lo + 1, n - 1)
        return lo, hi, fr

    lo_h, hi_h, fh = taps(h)
    lo_w, hi_w, fw = taps(w)
    y = (y[:, lo_h] * (1.0 - fh)[None, :, None, None]
         + y[:, hi_h] * fh[None, :, None, None])
    y = (y[:, :, lo_w] * (1.0 - fw)[None, None, :, None]
         + y[:, :, hi_w] * fw[None, None, :, None])
    return y


def reference(x, w1, w2, gamma, beta, eps=1e-5):
    hp = jax.lax.Precision.HIGHEST
    y = _bilinear_up2x_ref(jnp.einsum("bhwc,cd->bhwd", x, w1, precision=hp))
    y = _bilinear_up2x_ref(jnp.einsum("bhwc,cd->bhwd", y, w2, precision=hp))
    mu = y.mean(-1, keepdims=True)
    var = ((y - mu) ** 2).mean(-1, keepdims=True)
    return (y - mu) / jnp.sqrt(var + eps) * gamma + beta


# ----------------------------------- test -------------------------------------

if __name__ == "__main__":
    key = jax.random.PRNGKey(0)
    kx, k1, k2, kg, kb, kx2 = jax.random.split(key, 6)

    B, H, W, C = 2, 16, 8, 32
    x = jax.random.normal(kx, (B, H, W, C), jnp.float32)
    bound = 1.0 / (C ** 0.5)                      # ~ torch nn.Linear init scale
    w1 = jax.random.uniform(k1, (C, C), jnp.float32, -bound, bound)   # = W1.T
    w2 = jax.random.uniform(k2, (C, C), jnp.float32, -bound, bound)   # = W2.T
    gamma = 1.0 + 0.1 * jax.random.normal(kg, (C,), jnp.float32)
    beta = 0.1 * jax.random.normal(kb, (C,), jnp.float32)

    # 4 row-strips: exercises first / interior / last-strip halo clamping.
    out = jax.block_until_ready(
        final_upsample_x4(x, w1, w2, gamma, beta, block_rows=4))
    assert out.shape == (B, 4 * H, 4 * W, C), out.shape
    ref = reference(x, w1, w2, gamma, beta)
    err = float(jnp.max(jnp.abs(out - ref)))
    assert jnp.allclose(out, ref, atol=1e-2, rtol=1e-2), f"max abs err {err}"

    # Second config: small H with automatic strip selection.
    B2, H2 = 1, 4
    x2 = jax.random.normal(kx2, (B2, H2, W, C), jnp.float32)
    out2 = jax.block_until_ready(final_upsample_x4(x2, w1, w2, gamma, beta))
    assert out2.shape == (B2, 4 * H2, 4 * W, C), out2.shape
    ref2 = reference(x2, w1, w2, gamma, beta)
    err2 = float(jnp.max(jnp.abs(out2 - ref2)))
    assert jnp.allclose(out2, ref2, atol=1e-2, rtol=1e-2), f"max abs err {err2}"

    print("KERNEL_OK")
</pallas_src>

<mosaic_0001>
module attributes {stable_mosaic.version = 11 : i64} {
  func.func @_final_upsample_x4_kernel(%arg0: i32, %arg1: i32, %arg2: memref<1x1x8x32xf32, #tpu.memory_space<vmem>>, %arg3: memref<1x4x8x32xf32, #tpu.memory_space<vmem>>, %arg4: memref<1x1x8x32xf32, #tpu.memory_space<vmem>>, %arg5: memref<32x32xf32, #tpu.memory_space<vmem>>, %arg6: memref<32x32xf32, #tpu.memory_space<vmem>>, %arg7: memref<1x32xf32, #tpu.memory_space<vmem>>, %arg8: memref<1x32xf32, #tpu.memory_space<vmem>>, %arg9: memref<1x16x8x128xf32, #tpu.memory_space<vmem>>) attributes {dimension_semantics = [#tpu.dimension_semantics<parallel>, #tpu.dimension_semantics<parallel>], iteration_bounds = array<i64: 2, 4>, scalar_prefetch = 0 : i64, scratch_operands = 0 : i64, tpu.core_type = #tpu.core_type<tc>, window_params = [{transform_indices = @transform_0, window_bounds = array<i64: 1, 1, 8, 32>}, {transform_indices = @transform_1, window_bounds = array<i64: 1, 4, 8, 32>}, {transform_indices = @transform_2, window_bounds = array<i64: 1, 1, 8, 32>}, {pipeline_mode = #tpu.pipeline_mode<synchronous>, transform_indices = @transform_3, window_bounds = array<i64: 32, 32>}, {pipeline_mode = #tpu.pipeline_mode<synchronous>, transform_indices = @transform_4, window_bounds = array<i64: 32, 32>}, {pipeline_mode = #tpu.pipeline_mode<synchronous>, transform_indices = @transform_5, window_bounds = array<i64: 1, 32>}, {pipeline_mode = #tpu.pipeline_mode<synchronous>, transform_indices = @transform_6, window_bounds = array<i64: 1, 32>}, {transform_indices = @transform_7, window_bounds = array<i64: 1, 16, 8, 128>}]} {
    %c0 = arith.constant 0 : index
    %c0_0 = arith.constant 0 : index
    %c0_1 = arith.constant 0 : index
    %c0_2 = arith.constant 0 : index
    %0 = vector.load %arg2[%c0, %c0_0, %c0_1, %c0_2] : memref<1x1x8x32xf32, #tpu.memory_space<vmem>>, vector<1x1x8x32xf32>
    %1 = vector.shape_cast %0 : vector<1x1x8x32xf32> to vector<1x8x32xf32>
    %c0_3 = arith.constant 0 : index
    %c0_4 = arith.constant 0 : index
    %c0_5 = arith.constant 0 : index
    %c0_6 = arith.constant 0 : index
    %2 = vector.load %arg3[%c0_3, %c0_4, %c0_5, %c0_6] : memref<1x4x8x32xf32, #tpu.memory_space<vmem>>, vector<1x4x8x32xf32>
    %3 = vector.shape_cast %2 : vector<1x4x8x32xf32> to vector<4x8x32xf32>
    %c0_7 = arith.constant 0 : index
    %c0_8 = arith.constant 0 : index
    %c0_9 = arith.constant 0 : index
    %c0_10 = arith.constant 0 : index
    %4 = vector.load %arg4[%c0_7, %c0_8, %c0_9, %c0_10] : memref<1x1x8x32xf32, #tpu.memory_space<vmem>>, vector<1x1x8x32xf32>
    %5 = vector.shape_cast %4 : vector<1x1x8x32xf32> to vector<1x8x32xf32>
    %6 = tpu.concatenate %1, %3, %5 in 0 : vector<1x8x32xf32>, vector<4x8x32xf32>, vector<1x8x32xf32> -> vector<6x8x32xf32>
    %7 = vector.shape_cast %6 : vector<6x8x32xf32> to vector<48x32xf32>
    %c0_11 = arith.constant 0 : index
    %c0_12 = arith.constant 0 : index
    %8 = vector.load %arg5[%c0_11, %c0_12] : memref<32x32xf32, #tpu.memory_space<vmem>>, vector<32x32xf32>
    %cst = arith.constant dense<0.000000e+00> : vector<48x32xf32>
    %9 = tpu.matmul %7, %8, %cst {dimension_numbers = #tpu.dot_dimension_numbers<[1], [0], [0], [1], [0, 0, 1, 1], [], []>} : vector<48x32xf32>, vector<32x32xf32>, vector<48x32xf32> -> vector<48x32xf32>
    %c0_13 = arith.constant 0 : index
    %c0_14 = arith.constant 0 : index
    %10 = vector.load %arg6[%c0_13, %c0_14] : memref<32x32xf32, #tpu.memory_space<vmem>>, vector<32x32xf32>
    %cst_15 = arith.constant dense<0.000000e+00> : vector<48x32xf32>
    %11 = tpu.matmul %9, %10, %cst_15 {dimension_numbers = #tpu.dot_dimension_numbers<[1], [0], [0], [1], [0, 0, 1, 1], [], []>} : vector<48x32xf32>, vector<32x32xf32>, vector<48x32xf32> -> vector<48x32xf32>
    %12 = vector.shape_cast %11 : vector<48x32xf32> to vector<6x8x32xf32>
    %13 = vector.extract_strided_slice %12 {offsets = [0, 0, 0], sizes = [5, 8, 32], strides = [1, 1, 1]} : vector<6x8x32xf32> to vector<5x8x32xf32>
    %14 = vector.extract_strided_slice %12 {offsets = [1, 0, 0], sizes = [5, 8, 32], strides = [1, 1, 1]} : vector<6x8x32xf32> to vector<5x8x32xf32>
    %cst_16 = arith.constant 7.500000e-01 : f32
    %15 = vector.broadcast %cst_16 : f32 to vector<5x8x32xf32>
    %16 = arith.mulf %15, %13 : vector<5x8x32xf32>
    %cst_17 = arith.constant 2.500000e-01 : f32
    %17 = vector.broadcast %cst_17 : f32 to vector<5x8x32xf32>
    %18 = arith.mulf %17, %14 : vector<5x8x32xf32>
    %19 = arith.addf %16, %18 : vector<5x8x32xf32>
    %cst_18 = arith.constant 2.500000e-01 : f32
    %20 = vector.broadcast %cst_18 : f32 to vector<5x8x32xf32>
    %21 = arith.mulf %20, %13 : vector<5x8x32xf32>
    %cst_19 = arith.constant 7.500000e-01 : f32
    %22 = vector.broadcast %cst_19 : f32 to vector<5x8x32xf32>
    %23 = arith.mulf %22, %14 : vector<5x8x32xf32>
    %24 = arith.addf %21, %23 : vector<5x8x32xf32>
    %25 = vector.shape_cast %19 : vector<5x8x32xf32> to vector<5x1x8x32xf32>
    %26 = vector.shape_cast %24 : vector<5x8x32xf32> to vector<5x1x8x32xf32>
    %27 = tpu.concatenate %25, %26 in 1 : vector<5x1x8x32xf32>, vector<5x1x8x32xf32> -> vector<5x2x8x32xf32>
    %28 = vector.shape_cast %27 : vector<5x2x8x32xf32> to vector<10x8x32xf32>
    %29 = vector.extract_strided_slice %28 {offsets = [0, 0, 0], sizes = [10, 1, 32], strides = [1, 1, 1]} : vector<10x8x32xf32> to vector<10x1x32xf32>
    %30 = vector.extract_strided_slice %28 {offsets = [0, 0, 0], sizes = [10, 7, 32], strides = [1, 1, 1]} : vector<10x8x32xf32> to vector<10x7x32xf32>
    %31 = tpu.concatenate %29, %30 in 1 : vector<10x1x32xf32>, vector<10x7x32xf32> -> vector<10x8x32xf32>
    %32 = vector.extract_strided_slice %28 {offsets = [0, 1, 0], sizes = [10, 7, 32], strides = [1, 1, 1]} : vector<10x8x32xf32> to vector<10x7x32xf32>
    %33 = vector.extract_strided_slice %28 {offsets = [0, 7, 0], sizes = [10, 1, 32], strides = [1, 1, 1]} : vector<10x8x32xf32> to vector<10x1x32xf32>
    %34 = tpu.concatenate %32, %33 in 1 : vector<10x7x32xf32>, vector<10x1x32xf32> -> vector<10x8x32xf32>
    %cst_20 = arith.constant 2.500000e-01 : f32
    %35 = vector.broadcast %cst_20 : f32 to vector<10x8x32xf32>
    %36 = arith.mulf %35, %31 : vector<10x8x32xf32>
    %cst_21 = arith.constant 7.500000e-01 : f32
    %37 = vector.broadcast %cst_21 : f32 to vector<10x8x32xf32>
    %38 = arith.mulf %37, %28 : vector<10x8x32xf32>
    %39 = arith.addf %36, %38 : vector<10x8x32xf32>
    %cst_22 = arith.constant 7.500000e-01 : f32
    %40 = vector.broadcast %cst_22 : f32 to vector<10x8x32xf32>
    %41 = arith.mulf %40, %28 : vector<10x8x32xf32>
    %cst_23 = arith.constant 2.500000e-01 : f32
    %42 = vector.broadcast %cst_23 : f32 to vector<10x8x32xf32>
    %43 = arith.mulf %42, %34 : vector<10x8x32xf32>
    %44 = arith.addf %41, %43 : vector<10x8x32xf32>
    %45 = vector.extract_strided_slice %39 {offsets = [0, 0, 0], sizes = [8, 8, 32], strides = [1, 1, 1]} : vector<10x8x32xf32> to vector<8x8x32xf32>
    %46 = vector.extract_strided_slice %39 {offsets = [1, 0, 0], sizes = [8, 8, 32], strides = [1, 1, 1]} : vector<10x8x32xf32> to vector<8x8x32xf32>
    %47 = vector.extract_strided_slice %39 {offsets = [2, 0, 0], sizes = [8, 8, 32], strides = [1, 1, 1]} : vector<10x8x32xf32> to vector<8x8x32xf32>
    %cst_24 = arith.constant 2.500000e-01 : f32
    %48 = vector.broadcast %cst_24 : f32 to vector<8x8x32xf32>
    %49 = arith.mulf %48, %45 : vector<8x8x32xf32>
    %cst_25 = arith.constant 7.500000e-01 : f32
    %50 = vector.broadcast %cst_25 : f32 to vector<8x8x32xf32>
    %51 = arith.mulf %50, %46 : vector<8x8x32xf32>
    %52 = arith.addf %49, %51 : vector<8x8x32xf32>
    %cst_26 = arith.constant 7.500000e-01 : f32
    %53 = vector.broadcast %cst_26 : f32 to vector<8x8x32xf32>
    %54 = arith.mulf %53, %46 : vector<8x8x32xf32>
    %cst_27 = arith.constant 2.500000e-01 : f32
    %55 = vector.broadcast %cst_27 : f32 to vector<8x8x32xf32>
    %56 = arith.mulf %55, %47 : vector<8x8x32xf32>
    %57 = arith.addf %54, %56 : vector<8x8x32xf32>
    %58 = vector.shape_cast %52 : vector<8x8x32xf32> to vector<8x1x8x32xf32>
    %59 = vector.shape_cast %57 : vector<8x8x32xf32> to vector<8x1x8x32xf32>
    %60 = tpu.concatenate %58, %59 in 1 : vector<8x1x8x32xf32>, vector<8x1x8x32xf32> -> vector<8x2x8x32xf32>
    %61 = vector.shape_cast %60 : vector<8x2x8x32xf32> to vector<16x8x32xf32>
    %62 = vector.extract_strided_slice %44 {offsets = [0, 0, 0], sizes = [8, 8, 32], strides = [1, 1, 1]} : vector<10x8x32xf32> to vector<8x8x32xf32>
    %63 = vector.extract_strided_slice %44 {offsets = [1, 0, 0], sizes = [8, 8, 32], strides = [1, 1, 1]} : vector<10x8x32xf32> to vector<8x8x32xf32>
    %64 = vector.extract_strided_slice %44 {offsets = [2, 0, 0], sizes = [8, 8, 32], strides = [1, 1, 1]} : vector<10x8x32xf32> to vector<8x8x32xf32>
    %cst_28 = arith.constant 2.500000e-01 : f32
    %65 = vector.broadcast %cst_28 : f32 to vector<8x8x32xf32>
    %66 = arith.mulf %65, %62 : vector<8x8x32xf32>
    %cst_29 = arith.constant 7.500000e-01 : f32
    %67 = vector.broadcast %cst_29 : f32 to vector<8x8x32xf32>
    %68 = arith.mulf %67, %63 : vector<8x8x32xf32>
    %69 = arith.addf %66, %68 : vector<8x8x32xf32>
    %cst_30 = arith.constant 7.500000e-01 : f32
    %70 = vector.broadcast %cst_30 : f32 to vector<8x8x32xf32>
    %71 = arith.mulf %70, %63 : vector<8x8x32xf32>
    %cst_31 = arith.constant 2.500000e-01 : f32
    %72 = vector.broadcast %cst_31 : f32 to vector<8x8x32xf32>
    %73 = arith.mulf %72, %64 : vector<8x8x32xf32>
    %74 = arith.addf %71, %73 : vector<8x8x32xf32>
    %75 = vector.shape_cast %69 : vector<8x8x32xf32> to vector<8x1x8x32xf32>
    %76 = vector.shape_cast %74 : vector<8x8x32xf32> to vector<8x1x8x32xf32>
    %77 = tpu.concatenate %75, %76 in 1 : vector<8x1x8x32xf32>, vector<8x1x8x32xf32> -> vector<8x2x8x32xf32>
    %78 = vector.shape_cast %77 : vector<8x2x8x32xf32> to vector<16x8x32xf32>
    %79 = vector.extract_strided_slice %61 {offsets = [0, 0, 0], sizes = [16, 1, 32], strides = [1, 1, 1]} : vector<16x8x32xf32> to vector<16x1x32xf32>
    %80 = vector.extract_strided_slice %78 {offsets = [0, 0, 0], sizes = [16, 7, 32], strides = [1, 1, 1]} : vector<16x8x32xf32> to vector<16x7x32xf32>
    %81 = tpu.concatenate %79, %80 in 1 : vector<16x1x32xf32>, vector<16x7x32xf32> -> vector<16x8x32xf32>
    %82 = vector.extract_strided_slice %61 {offsets = [0, 1, 0], sizes = [16, 7, 32], strides = [1, 1, 1]} : vector<16x8x32xf32> to vector<16x7x32xf32>
    %83 = vector.extract_strided_slice %78 {offsets = [0, 7, 0], sizes = [16, 1, 32], strides = [1, 1, 1]} : vector<16x8x32xf32> to vector<16x1x32xf32>
    %84 = tpu.concatenate %82, %83 in 1 : vector<16x7x32xf32>, vector<16x1x32xf32> -> vector<16x8x32xf32>
    %cst_32 = arith.constant 2.500000e-01 : f32
    %85 = vector.broadcast %cst_32 : f32 to vector<16x8x32xf32>
    %86 = arith.mulf %85, %81 : vector<16x8x32xf32>
    %cst_33 = arith.constant 7.500000e-01 : f32
    %87 = vector.broadcast %cst_33 : f32 to vector<16x8x32xf32>
    %88 = arith.mulf %87, %61 : vector<16x8x32xf32>
    %89 = arith.addf %86, %88 : vector<16x8x32xf32>
    %cst_34 = arith.constant 7.500000e-01 : f32
    %90 = vector.broadcast %cst_34 : f32 to vector<16x8x32xf32>
    %91 = arith.mulf %90, %61 : vector<16x8x32xf32>
    %cst_35 = arith.constant 2.500000e-01 : f32
    %92 = vector.broadcast %cst_35 : f32 to vector<16x8x32xf32>
    %93 = arith.mulf %92, %78 : vector<16x8x32xf32>
    %94 = arith.addf %91, %93 : vector<16x8x32xf32>
    %cst_36 = arith.constant 2.500000e-01 : f32
    %95 = vector.broadcast %cst_36 : f32 to vector<16x8x32xf32>
    %96 = arith.mulf %95, %61 : vector<16x8x32xf32>
    %cst_37 = arith.constant 7.500000e-01 : f32
    %97 = vector.broadcast %cst_37 : f32 to vector<16x8x32xf32>
    %98 = arith.mulf %97, %78 : vector<16x8x32xf32>
    %99 = arith.addf %96, %98 : vector<16x8x32xf32>
    %cst_38 = arith.constant 7.500000e-01 : f32
    %100 = vector.broadcast %cst_38 : f32 to vector<16x8x32xf32>
    %101 = arith.mulf %100, %78 : vector<16x8x32xf32>
    %cst_39 = arith.constant 2.500000e-01 : f32
    %102 = vector.broadcast %cst_39 : f32 to vector<16x8x32xf32>
    %103 = arith.mulf %102, %84 : vector<16x8x32xf32>
    %104 = arith.addf %101, %103 : vector<16x8x32xf32>
    %105 = vector.shape_cast %89 : vector<16x8x32xf32> to vector<1x16x8x32xf32>
    %106 = vector.shape_cast %94 : vector<16x8x32xf32> to vector<1x16x8x32xf32>
    %107 = vector.shape_cast %99 : vector<16x8x32xf32> to vector<1x16x8x32xf32>
    %108 = vector.shape_cast %104 : vector<16x8x32xf32> to vector<1x16x8x32xf32>
    %109 = tpu.concatenate %105, %106, %107, %108 in 0 : vector<1x16x8x32xf32>, vector<1x16x8x32xf32>, vector<1x16x8x32xf32>, vector<1x16x8x32xf32> -> vector<4x16x8x32xf32>
    %cst_40 = arith.constant dense<0.000000e+00> : vector<4x16x8xf32>
    %110 = vector.multi_reduction <add>, %109, %cst_40 [3] : vector<4x16x8x32xf32> to vector<4x16x8xf32>
    %111 = vector.shape_cast %110 : vector<4x16x8xf32> to vector<4x16x8x1xf32>
    %cst_41 = arith.constant 3.200000e+01 : f32
    %112 = vector.broadcast %cst_41 : f32 to vector<4x16x8x1xf32>
    %113 = arith.divf %111, %112 : vector<4x16x8x1xf32>
    %114 = vector.broadcast %113 : vector<4x16x8x1xf32> to vector<4x16x8x32xf32>
    %115 = arith.subf %109, %114 : vector<4x16x8x32xf32>
    %116 = arith.mulf %115, %115 : vector<4x16x8x32xf32>
    %cst_42 = arith.constant dense<0.000000e+00> : vector<4x16x8xf32>
    %117 = vector.multi_reduction <add>, %116, %cst_42 [3] : vector<4x16x8x32xf32> to vector<4x16x8xf32>
    %118 = vector.shape_cast %117 : vector<4x16x8xf32> to vector<4x16x8x1xf32>
    %cst_43 = arith.constant 3.200000e+01 : f32
    %119 = vector.broadcast %cst_43 : f32 to vector<4x16x8x1xf32>
    %120 = arith.divf %118, %119 : vector<4x16x8x1xf32>
    %121 = vector.broadcast %113 : vector<4x16x8x1xf32> to vector<4x16x8x32xf32>
    %122 = arith.subf %109, %121 : vector<4x16x8x32xf32>
    %cst_44 = arith.constant 9.99999974E-6 : f32
    %123 = vector.broadcast %cst_44 : f32 to vector<4x16x8x1xf32>
    %124 = arith.addf %120, %123 : vector<4x16x8x1xf32>
    %125 = math.rsqrt %124 : vector<4x16x8x1xf32>
    %126 = vector.broadcast %125 : vector<4x16x8x1xf32> to vector<4x16x8x32xf32>
    %127 = arith.mulf %122, %126 : vector<4x16x8x32xf32>
    %c0_45 = arith.constant 0 : index
    %c0_46 = arith.constant 0 : index
    %128 = vector.load %arg7[%c0_45, %c0_46] : memref<1x32xf32, #tpu.memory_space<vmem>>, vector<1x32xf32>
    %129 = vector.shape_cast %128 : vector<1x32xf32> to vector<1x1x1x32xf32>
    %130 = vector.broadcast %129 : vector<1x1x1x32xf32> to vector<4x16x8x32xf32>
    %131 = arith.mulf %127, %130 : vector<4x16x8x32xf32>
    %c0_47 = arith.constant 0 : index
    %c0_48 = arith.constant 0 : index
    %132 = vector.load %arg8[%c0_47, %c0_48] : memref<1x32xf32, #tpu.memory_space<vmem>>, vector<1x32xf32>
    %133 = vector.shape_cast %132 : vector<1x32xf32> to vector<1x1x1x32xf32>
    %134 = vector.broadcast %133 : vector<1x1x1x32xf32> to vector<4x16x8x32xf32>
    %135 = arith.addf %131, %134 : vector<4x16x8x32xf32>
    %136 = vector.extract_strided_slice %135 {offsets = [0, 0, 0, 0], sizes = [1, 16, 8, 32], strides = [1, 1, 1, 1]} : vector<4x16x8x32xf32> to vector<1x16x8x32xf32>
    %137 = vector.shape_cast %136 : vector<1x16x8x32xf32> to vector<16x8x32xf32>
    %138 = vector.extract_strided_slice %135 {offsets = [1, 0, 0, 0], sizes = [1, 16, 8, 32], strides = [1, 1, 1, 1]} : vector<4x16x8x32xf32> to vector<1x16x8x32xf32>
    %139 = vector.shape_cast %138 : vector<1x16x8x32xf32> to vector<16x8x32xf32>
    %140 = vector.extract_strided_slice %135 {offsets = [2, 0, 0, 0], sizes = [1, 16, 8, 32], strides = [1, 1, 1, 1]} : vector<4x16x8x32xf32> to vector<1x16x8x32xf32>
    %141 = vector.shape_cast %140 : vector<1x16x8x32xf32> to vector<16x8x32xf32>
    %142 = vector.extract_strided_slice %135 {offsets = [3, 0, 0, 0], sizes = [1, 16, 8, 32], strides = [1, 1, 1, 1]} : vector<4x16x8x32xf32> to vector<1x16x8x32xf32>
    %143 = vector.shape_cast %142 : vector<1x16x8x32xf32> to vector<16x8x32xf32>
    %144 = tpu.concatenate %137, %139, %141, %143 in 2 : vector<16x8x32xf32>, vector<16x8x32xf32>, vector<16x8x32xf32>, vector<16x8x32xf32> -> vector<16x8x128xf32>
    %c0_49 = arith.constant 0 : index
    %c0_50 = arith.constant 0 : index
    %c0_51 = arith.constant 0 : index
    %c0_52 = arith.constant 0 : index
    %145 = vector.load %arg9[%c0_49, %c0_50, %c0_51, %c0_52] : memref<1x16x8x128xf32, #tpu.memory_space<vmem>>, vector<1x16x8x128xf32>
    %146 = vector.shape_cast %145 : vector<1x16x8x128xf32> to vector<16x8x128xf32>
    %147 = vector.shape_cast %144 : vector<16x8x128xf32> to vector<1x16x8x128xf32>
    tpu.vector_store %arg9[%c0_49, %c0_50, %c0_51, %c0_52], %147 {strides = array<i32>} : memref<1x16x8x128xf32, #tpu.memory_space<vmem>>, vector<1x16x8x128xf32>,
    return
  }
  func.func @transform_0(%arg0: i32, %arg1: i32) -> (i32, i32, i32, i32) {
    %c4_i32 = arith.constant 4 : i32
    %0 = arith.muli %arg1, %c4_i32 : i32
    %c1_i32 = arith.constant 1 : i32
    %1 = arith.subi %0, %c1_i32 : i32
    %c0_i32 = arith.constant 0 : i32
    %2 = arith.maxsi %1, %c0_i32 : i32
    %c0_i32_0 = arith.constant 0 : i32
    %c0_i32_1 = arith.constant 0 : i32
    %c0_i32_2 = arith.constant 0 : i32
    return %arg0, %2, %c0_i32_0, %c0_i32_1 : i32, i32, i32, i32
  }
  func.func @transform_1(%arg0: i32, %arg1: i32) -> (i32, i32, i32, i32) {
    %c0_i32 = arith.constant 0 : i32
    %c0_i32_0 = arith.constant 0 : i32
    %c0_i32_1 = arith.constant 0 : i32
    return %arg0, %arg1, %c0_i32, %c0_i32_0 : i32, i32, i32, i32
  }
  func.func @transform_2(%arg0: i32, %arg1: i32) -> (i32, i32, i32, i32) {
    %c1_i32 = arith.constant 1 : i32
    %0 = arith.addi %arg1, %c1_i32 : i32
    %c4_i32 = arith.constant 4 : i32
    %1 = arith.muli %0, %c4_i32 : i32
    %c15_i32 = arith.constant 15 : i32
    %2 = arith.minsi %1, %c15_i32 : i32
    %c0_i32 = arith.constant 0 : i32
    %c0_i32_0 = arith.constant 0 : i32
    %c0_i32_1 = arith.constant 0 : i32
    return %arg0, %2, %c0_i32, %c0_i32_0 : i32, i32, i32, i32
  }
  func.func @transform_3(%arg0: i32, %arg1: i32) -> (i32, i32) {
    %c0_i32 = arith.constant 0 : i32
    %c0_i32_0 = arith.constant 0 : i32
    %c0_i32_1 = arith.constant 0 : i32
    return %c0_i32, %c0_i32_0 : i32, i32
  }
  func.func @transform_4(%arg0: i32, %arg1: i32) -> (i32, i32) {
    %c0_i32 = arith.constant 0 : i32
    %c0_i32_0 = arith.constant 0 : i32
    %c0_i32_1 = arith.constant 0 : i32
    return %c0_i32, %c0_i32_0 : i32, i32
  }
  func.func @transform_5(%arg0: i32, %arg1: i32) -> (i32, i32) {
    %c0_i32 = arith.constant 0 : i32
    %c0_i32_0 = arith.constant 0 : i32
    %c0_i32_1 = arith.constant 0 : i32
    return %c0_i32, %c0_i32_0 : i32, i32
  }
  func.func @transform_6(%arg0: i32, %arg1: i32) -> (i32, i32) {
    %c0_i32 = arith.constant 0 : i32
    %c0_i32_0 = arith.constant 0 : i32
    %c0_i32_1 = arith.constant 0 : i32
    return %c0_i32, %c0_i32_0 : i32, i32
  }
  func.func @transform_7(%arg0: i32, %arg1: i32) -> (i32, i32, i32, i32) {
    %c0_i32 = arith.constant 0 : i32
    %c0_i32_0 = arith.constant 0 : i32
    %c0_i32_1 = arith.constant 0 : i32
    return %arg0, %arg1, %c0_i32, %c0_i32_0 : i32, i32, i32, i32
  }
}

</mosaic_0001>

<llo_original>
// kernel: final_upsample_x4.1
$region0: #{final_upsample_x4.1}
  #allocation0 [shape = 'u32[]', space=smem, size = 0x4, offset = 0x4, fixed_abs, tag = 'smem constant byte address 0x4 - core index']
  #allocation1 [shape = 'u32[144,128]{1,0:T(1,128)}', space=vmem, size = 0x12000, scoped, tag = 'internal scratch']
  %s0 = inlined_call_operand.hbm [shape: f32[2,16,8,32], index: 0, kind: input, shape index: {}, may-alias: {0,1,2}]
  %s1 = inlined_call_operand.hbm [shape: f32[2,16,8,32], index: 1, kind: input, shape index: {}, may-alias: {0,1,2}]
  %s2 = inlined_call_operand.hbm [shape: f32[2,16,8,32], index: 2, kind: input, shape index: {}, may-alias: {0,1,2}]
  %s3 = inlined_call_operand.hbm [shape: f32[32,32], index: 3, kind: input, shape index: {}]
  %s4 = inlined_call_operand.hbm [shape: f32[32,32], index: 4, kind: input, shape index: {}]
  %s5 = inlined_call_operand.vmem [shape: f32[1,32], index: 5, kind: input, shape index: {}]
  %s6 = inlined_call_operand.vmem [shape: f32[1,32], index: 6, kind: input, shape index: {}]
  %s7 = inlined_call_operand.vmem [shape: f32[2,64,8,128], index: 7, kind: output, shape index: {}]
  %s8 = sld [smem:[#allocation0]]
  $region81: #{final_upsample_x4.1} parent=0
    _
  %s10 = ssub.s32 1, %s8
  %s11 = scalar_select 0, %s10, %s8
  $region1: #{final_upsample_x4.1} parent=0
    #allocation2 [shape = 'u8[8192]{0}', space=vmem, size = 0x2000, scoped, tag = 'input window, operand 0']
    #allocation3 [shape = 's32[2]{0}', space=sflag, size = 0x8, scoped, tag = 'scoped memory for final_upsample_x4.1']
    #allocation4 [shape = 'u8[32768]{0}', space=vmem, size = 0x8000, scoped, tag = 'input window, operand 1']
    #allocation5 [shape = 's32[2]{0}', space=sflag, size = 0x8, scoped, tag = 'scoped memory for final_upsample_x4.1']
    #allocation6 [shape = 'u8[8192]{0}', space=vmem, size = 0x2000, scoped, tag = 'input window, operand 2']
    #allocation7 [shape = 'u8[16384]{0}', space=vmem, size = 0x4000, scoped, tag = 'input window, operand 3, single buffered']
    #allocation8 [shape = 's32[1]{0}', space=sflag, size = 0x4, scoped, tag = 'scoped memory for final_upsample_x4.1']
    #allocation9 [shape = 'u8[16384]{0}', space=vmem, size = 0x4000, scoped, tag = 'input window, operand 4, single buffered']
    %12 = vsyncpa [#allocation3], 0
    %s13 = scalar_lea.sflag [#allocation3], 1
    %14 = vsyncpa %s13, 0
    %15 = vsyncpa [#allocation5], 0
    %s16 = scalar_lea.sflag [#allocation5], 1
    %17 = vsyncpa %s16, 0
    %18 = vsyncpa [#allocation8], 0
    loop: start=0, step=1, limit=10
    $region2: #{final_upsample_x4.1} parent=1 // loop_pre_header
      _
    $region3: #{final_upsample_x4.1} parent=1 // loop_header
      %s20 = sphi 0, %s24
      %p21 = scmp.ge.s32.totalorder %s20, 10
      %s27 = sphi 0, %s39
      %s28 = sphi 0, %s35
      %s29 = sphi 0, %s27
      %s30 = sphi 0, %s28
      %s31 = sphi 0, %s29
      %s32 = sphi 0, %s30
      %s52 = sphi 0, %s54
      %s55 = sphi 0, %s52
      %s56 = sphi 0, %s55
      %s72 = sphi 0, %s56
      %s80 = sphi 0, %s82
      %s83 = sphi 0, %s80
      %s84 = sphi 0, %s83
      %s100 = sphi 0, %s84
      %s116 = sphi 0, %s118
      %s119 = sphi 0, %s116
      %s120 = sphi 0, %s119
      %s136 = sphi 0, %s120
      %s140 = sphi 0, %s140
      %s142 = sphi 0, %s140
      %s143 = sphi 0, %s142
      %s157 = sphi 0, %s143
      %s161 = sphi 0, %s161
      %s163 = sphi 0, %s161
      %s164 = sphi 0, %s163
      %s178 = sphi 0, %s164
      %s182 = sphi 0, %s182
      %s184 = sphi 0, %s182
      %s185 = sphi 0, %s184
      %s199 = sphi 0, %s185
      %s203 = sphi 0, %s203
      %s205 = sphi 0, %s203
      %s206 = sphi 0, %s205
      %s220 = sphi 0, %s206
      %s228 = sphi 0, %s230
      %s231 = sphi 0, %s228
      %s232 = sphi 0, %s231
      %s248 = sphi 0, %s232
    $region4: #{final_upsample_x4.1} parent=1 // loop_header_branch
      %23 = sbr.rel (%p21) target = $region8
    $region5: #{final_upsample_x4.1} parent=1 // loop_body
      %s25 = ssub.s32 %s20, 1
      %s26 = ssub.s32 %s20, 2
      %s33 = sadd.s32 1, %s28
      %p34 = scmp.ge.s32.totalorder %s33, 4
      %s35 = scalar_select %p34, 0, %s33
      %s36 = sadd.s32 1, %s27
      %s37 = scalar_select %p34, %s36, %s27
      %p38 = scmp.ge.s32.totalorder %s37, 2
      %s39 = scalar_select %p38, 0, %s37
      %s40 = smul.u32 %s28, 4
      %s41 = ssub.s32 %s40, 1
      %p42 = scmp.gt.s32.totalorder %s41, 0
      %s43 = scalar_select %p42, %s41, 0
      %s44 = smul.u32 %s35, 4
      %s45 = ssub.s32 %s44, 1
      %p46 = scmp.gt.s32.totalorder %s45, 0
      %s47 = scalar_select %p46, %s45, 0
      %s48 = ssub.s32 %s27, %s39
      %s49 = ssub.s32 %s43, %s47
      %s50 = sor.u32 %s48, %s49
      %p51 = scmp.eq.s32.totalorder %s50, 0
      %s53 = sadd.s32 %s52, 1
      %s54 = scalar_select %p51, %s52, %s53
      %p57 = pneg %p51
      %p58 = scmp.eq.s32.totalorder %s20, 7
      %p59 = por %p57, %p58
      %p60 = scmp.ne.s32.totalorder %s52, %s55
      %p61 = scmp.eq.s32.totalorder %s20, 0
      %p62 = por %p60, %p61
      %p63 = scmp.ne.s32.totalorder %s52, %s55
      %p64 = scmp.eq.s32.totalorder %s25, 7
      %p65 = por %p63, %p64
      %p66 = scmp.ne.s32.totalorder %s55, %s56
      %p67 = scmp.eq.s32.totalorder %s25, 0
      %p68 = por %p66, %p67
      %p69 = scmp.ne.s32.totalorder %s55, %s56
      %p70 = scmp.eq.s32.totalorder %s26, 7
      %p71 = por %p69, %p70
      %p73 = scmp.ne.s32.totalorder %s56, %s72
      %p74 = scmp.eq.s32.totalorder %s26, 0
      %p75 = por %p73, %p74
      %s76 = ssub.s32 %s27, %s39
      %s77 = ssub.s32 %s28, %s35
      %s78 = sor.u32 %s76, %s77
      %p79 = scmp.eq.s32.totalorder %s78, 0
      %s81 = sadd.s32 %s80, 1
      %s82 = scalar_select %p79, %s80, %s81
      %p85 = pneg %p79
      %p86 = scmp.eq.s32.totalorder %s20, 7
      %p87 = por %p85, %p86
      %p88 = scmp.ne.s32.totalorder %s80, %s83
      %p89 = scmp.eq.s32.totalorder %s20, 0
      %p90 = por %p88, %p89
      %p91 = scmp.ne.s32.totalorder %s80, %s83
      %p92 = scmp.eq.s32.totalorder %s25, 7
      %p93 = por %p91, %p92
      %p94 = scmp.ne.s32.totalorder %s83, %s84
      %p95 = scmp.eq.s32.totalorder %s25, 0
      %p96 = por %p94, %p95
      %p97 = scmp.ne.s32.totalorder %s83, %s84
      %p98 = scmp.eq.s32.totalorder %s26, 7
      %p99 = por %p97, %p98
      %p101 = scmp.ne.s32.totalorder %s84, %s100
      %p102 = scmp.eq.s32.totalorder %s26, 0
      %p103 = por %p101, %p102
      %s104 = sadd.s32 %s28, 1
      %s105 = smul.u32 %s104, 4
      %p106 = scmp.lt.s32.totalorder %s105, 15
      %s107 = scalar_select %p106, %s105, 15
      %s108 = sadd.s32 %s35, 1
      %s109 = smul.u32 %s108, 4
      %p110 = scmp.lt.s32.totalorder %s109, 15
      %s111 = scalar_select %p110, %s109, 15
      %s112 = ssub.s32 %s27, %s39
      %s113 = ssub.s32 %s107, %s111
      %s114 = sor.u32 %s112, %s113
      %p115 = scmp.eq.s32.totalorder %s114, 0
      %s117 = sadd.s32 %s116, 1
      %s118 = scalar_select %p115, %s116, %s117
      %p121 = pneg %p115
      %p122 = scmp.eq.s32.totalorder %s20, 7
      %p123 = por %p121, %p122
      %p124 = scmp.ne.s32.totalorder %s116, %s119
      %p125 = scmp.eq.s32.totalorder %s20, 0
      %p126 = por %p124, %p125
      %p127 = scmp.ne.s32.totalorder %s116, %s119
      %p128 = scmp.eq.s32.totalorder %s25, 7
      %p129 = por %p127, %p128
      %p130 = scmp.ne.s32.totalorder %s119, %s120
      %p131 = scmp.eq.s32.totalorder %s25, 0
      %p132 = por %p130, %p131
      %p133 = scmp.ne.s32.totalorder %s119, %s120
      %p134 = scmp.eq.s32.totalorder %s26, 7
      %p135 = por %p133, %p134
      %p137 = scmp.ne.s32.totalorder %s120, %s136
      %p138 = scmp.eq.s32.totalorder %s26, 0
      %p139 = por %p137, %p138
      %s141 = sadd.s32 %s140, 1
      %p144 = scmp.eq.s32.totalorder %s20, 7
      %p145 = scmp.ne.s32.totalorder %s140, %s142
      %p146 = scmp.eq.s32.totalorder %s20, 0
      %p147 = por %p145, %p146
      %p148 = scmp.ne.s32.totalorder %s140, %s142
      %p149 = scmp.eq.s32.totalorder %s25, 7
      %p150 = por %p148, %p149
      %p151 = scmp.ne.s32.totalorder %s142, %s143
      %p152 = scmp.eq.s32.totalorder %s25, 0
      %p153 = por %p151, %p152
      %p154 = scmp.ne.s32.totalorder %s142, %s143
      %p155 = scmp.eq.s32.totalorder %s26, 7
      %p156 = por %p154, %p155
      %p158 = scmp.ne.s32.totalorder %s143, %s157
      %p159 = scmp.eq.s32.totalorder %s26, 0
      %p160 = por %p158, %p159
      %s162 = sadd.s32 %s161, 1
      %p165 = scmp.eq.s32.totalorder %s20, 7
      %p166 = scmp.ne.s32.totalorder %s161, %s163
      %p167 = scmp.eq.s32.totalorder %s20, 0
      %p168 = por %p166, %p167
      %p169 = scmp.ne.s32.totalorder %s161, %s163
      %p170 = scmp.eq.s32.totalorder %s25, 7
      %p171 = por %p169, %p170
      %p172 = scmp.ne.s32.totalorder %s163, %s164
      %p173 = scmp.eq.s32.totalorder %s25, 0
      %p174 = por %p172, %p173
      %p175 = scmp.ne.s32.totalorder %s163, %s164
      %p176 = scmp.eq.s32.totalorder %s26, 7
      %p177 = por %p175, %p176
      %p179 = scmp.ne.s32.totalorder %s164, %s178
      %p180 = scmp.eq.s32.totalorder %s26, 0
      %p181 = por %p179, %p180
      %s183 = sadd.s32 %s182, 1
      %p186 = scmp.eq.s32.totalorder %s20, 7
      %p187 = scmp.ne.s32.totalorder %s182, %s184
      %p188 = scmp.eq.s32.totalorder %s20, 0
      %p189 = por %p187, %p188
      %p190 = scmp.ne.s32.totalorder %s182, %s184
      %p191 = scmp.eq.s32.totalorder %s25, 7
      %p192 = por %p190, %p191
      %p193 = scmp.ne.s32.totalorder %s184, %s185
      %p194 = scmp.eq.s32.totalorder %s25, 0
      %p195 = por %p193, %p194
      %p196 = scmp.ne.s32.totalorder %s184, %s185
      %p197 = scmp.eq.s32.totalorder %s26, 7
      %p198 = por %p196, %p197
      %p200 = scmp.ne.s32.totalorder %s185, %s199
      %p201 = scmp.eq.s32.totalorder %s26, 0
      %p202 = por %p200, %p201
      %s204 = sadd.s32 %s203, 1
      %p207 = scmp.eq.s32.totalorder %s20, 7
      %p208 = scmp.ne.s32.totalorder %s203, %s205
      %p209 = scmp.eq.s32.totalorder %s20, 0
      %p210 = por %p208, %p209
      %p211 = scmp.ne.s32.totalorder %s203, %s205
      %p212 = scmp.eq.s32.totalorder %s25, 7
      %p213 = por %p211, %p212
      %p214 = scmp.ne.s32.totalorder %s205, %s206
      %p215 = scmp.eq.s32.totalorder %s25, 0
      %p216 = por %p214, %p215
      %p217 = scmp.ne.s32.totalorder %s205, %s206
      %p218 = scmp.eq.s32.totalorder %s26, 7
      %p219 = por %p217, %p218
      %p221 = scmp.ne.s32.totalorder %s206, %s220
      %p222 = scmp.eq.s32.totalorder %s26, 0
      %p223 = por %p221, %p222
      %s224 = ssub.s32 %s27, %s39
      %s225 = ssub.s32 %s28, %s35
      %s226 = sor.u32 %s224, %s225
      %p227 = scmp.eq.s32.totalorder %s226, 0
      %s229 = sadd.s32 %s228, 1
      %s230 = scalar_select %p227, %s228, %s229
      %p233 = pneg %p227
      %p234 = scmp.eq.s32.totalorder %s20, 7
      %p235 = por %p233, %p234
      %p236 = scmp.ne.s32.totalorder %s228, %s231
      %p237 = scmp.eq.s32.totalorder %s20, 0
      %p238 = por %p236, %p237
      %p239 = scmp.ne.s32.totalorder %s228, %s231
      %p240 = scmp.eq.s32.totalorder %s25, 7
      %p241 = por %p239, %p240
      %p242 = scmp.ne.s32.totalorder %s231, %s232
      %p243 = scmp.eq.s32.totalorder %s25, 0
      %p244 = por %p242, %p243
      %p245 = scmp.ne.s32.totalorder %s231, %s232
      %p246 = scmp.eq.s32.totalorder %s26, 7
      %p247 = por %p245, %p246
      %p249 = scmp.ne.s32.totalorder %s232, %s248
      %p250 = scmp.eq.s32.totalorder %s26, 0
      %p251 = por %p249, %p250
      %p252 = scmp.le.s32.totalorder 1, %s20
      %p253 = scmp.lt.s32.totalorder %s20, 9
      %p254 = pnand %p252, %p253
      %p255 = pneg %p254
      // Predicated region
      $region9: #{final_upsample_x4.1} parent=5 // pred_check
        _
      $region10: #{final_upsample_x4.1} parent=5 // pred_check_branch
        %257 = sbr.rel (%p254) target = $region12
      $region11: #{final_upsample_x4.1} parent=5 // pred_region
        %s258 = ssub.s32 %s20, 1
        // Predicated region
        $region13: #{final_upsample_x4.1} parent=11 // pred_check
          %p259 = pneg %p153
        $region14: #{final_upsample_x4.1} parent=11 // pred_check_branch
          %261 = sbr.rel (%p259) target = $region16
        $region15: #{final_upsample_x4.1} parent=11 // pred_region
          %s263 = ssub.s32 512, 512
          %264 = vsyncadd [#allocation8], %s263
          %s265 = sshll.u32 [#allocation7], 4
          %s266 = int_to_ptr.vmem [resolvable:$true] %s265
          %271 = dma.hbm_to_vmem [thread:$0]  %s3, 512, %s266, [#allocation8], 128, 128, 8
        $region16: #{final_upsample_x4.1} parent=11 // pred_fallthru
          _
        // Predicated region
        $region17: #{final_upsample_x4.1} parent=11 // pred_check
          %p272 = pneg %p174
        $region18: #{final_upsample_x4.1} parent=11 // pred_check_branch
          %274 = sbr.rel (%p272) target = $region20
        $region19: #{final_upsample_x4.1} parent=11 // pred_region
          %s276 = ssub.s32 512, 512
          %277 = vsyncadd [#allocation8], %s276
          %s278 = sshll.u32 [#allocation9], 4
          %s279 = int_to_ptr.vmem [resolvable:$true] %s278
          %284 = dma.hbm_to_vmem [thread:$0]  %s4, 512, %s279, [#allocation8], 128, 128, 8
        $region20: #{final_upsample_x4.1} parent=11 // pred_fallthru
          _
        // Predicated region
        $region21: #{final_upsample_x4.1} parent=11 // pred_check
          %p285 = pneg %p195
        $region22: #{final_upsample_x4.1} parent=11 // pred_check_branch
          %287 = sbr.rel (%p285) target = $region24
        $region23: #{final_upsample_x4.1} parent=11 // pred_region
          _
        $region24: #{final_upsample_x4.1} parent=11 // pred_fallthru
          _
        // Predicated region
        $region25: #{final_upsample_x4.1} parent=11 // pred_check
          %p288 = pneg %p216
        $region26: #{final_upsample_x4.1} parent=11 // pred_check_branch
          %290 = sbr.rel (%p288) target = $region28
        $region27: #{final_upsample_x4.1} parent=11 // pred_region
          _
        $region28: #{final_upsample_x4.1} parent=11 // pred_fallthru
          _
      $region12: #{final_upsample_x4.1} parent=5 // pred_fallthru
        _
      %p291 = scmp.lt.s32.totalorder %s20, 8
      // Predicated region
      $region29: #{final_upsample_x4.1} parent=5 // pred_check
        %p292 = pneg %p291
      $region30: #{final_upsample_x4.1} parent=5 // pred_check_branch
        %294 = sbr.rel (%p292) target = $region32
      $region31: #{final_upsample_x4.1} parent=5 // pred_region
        // Predicated region
        $region33: #{final_upsample_x4.1} parent=31 // pred_check
          %p295 = pneg %p62
        $region34: #{final_upsample_x4.1} parent=31 // pred_check_branch
          %297 = sbr.rel (%p295) target = $region36
        $region35: #{final_upsample_x4.1} parent=31 // pred_region
          %s298 = sand.u32 %s52, 1
          %s299 = scalar_lea.sflag [#allocation3], %s298
          %s300 = sand.u32 %s52, 1
          %s301 = smul.addr %s300, 8
          %s302 = scalar_lea.vmem [#allocation2], %s301
          %s303 = smul.u32 %s28, 4
          %s304 = ssub.s32 %s303, 1
          %p305 = scmp.gt.s32.totalorder %s304, 0
          %s306 = scalar_select %p305, %s304, 0
          %s308 = ssub.s32 128, 128
          %309 = vsyncadd %s299, %s308
          %s310 = smul.addr %s27, 16
          %s311 = sadd.s32 %s306, %s310
          %s312 = smul.addr %s311, 128
          %s313 = scalar_lea.hbm %s0, %s312
          %s315 = sshll.u32 %s302, 4
          %s316 = int_to_ptr.vmem [resolvable:$true] %s315
          %318 = dma.hbm_to_vmem [thread:$0]  %s313, 128, %s316, %s299
        $region36: #{final_upsample_x4.1} parent=31 // pred_fallthru
          _
        // Predicated region
        $region37: #{final_upsample_x4.1} parent=31 // pred_check
          %p319 = pneg %p90
        $region38: #{final_upsample_x4.1} parent=31 // pred_check_branch
          %321 = sbr.rel (%p319) target = $region40
        $region39: #{final_upsample_x4.1} parent=31 // pred_region
          %s322 = sand.u32 %s20, 1
          %s323 = scalar_lea.sflag [#allocation5], %s322
          %s324 = sand.u32 %s80, 1
          %s325 = smul.addr %s324, 32
          %s326 = scalar_lea.vmem [#allocation4], %s325
          %s327 = smul.u32 4, %s28
          %s329 = ssub.s32 512, 512
          %330 = vsyncadd %s323, %s329
          %s331 = smul.addr %s27, 16
          %s332 = sadd.s32 %s327, %s331
          %s333 = smul.addr %s332, 128
          %s334 = scalar_lea.hbm %s1, %s333
          %s335 = sshll.u32 %s326, 4
          %s336 = int_to_ptr.vmem [resolvable:$true] %s335
          %341 = dma.hbm_to_vmem [thread:$0]  %s334, 512, %s336, %s323, 128, 128, 8
        $region40: #{final_upsample_x4.1} parent=31 // pred_fallthru
          _
        // Predicated region
        $region41: #{final_upsample_x4.1} parent=31 // pred_check
          %p342 = pneg %p126
        $region42: #{final_upsample_x4.1} parent=31 // pred_check_branch
          %344 = sbr.rel (%p342) target = $region44
        $region43: #{final_upsample_x4.1} parent=31 // pred_region
          %s345 = sand.u32 %s20, 1
          %s346 = scalar_lea.sflag [#allocation5], %s345
          %s347 = sand.u32 %s116, 1
          %s348 = smul.addr %s347, 8
          %s349 = scalar_lea.vmem [#allocation6], %s348
          %s350 = sadd.s32 %s28, 1
          %s351 = smul.u32 %s350, 4
          %p352 = scmp.lt.s32.totalorder %s351, 15
          %s353 = scalar_select %p352, %s351, 15
          %s355 = ssub.s32 128, 128
          %356 = vsyncadd %s346, %s355
          %s357 = smul.addr %s27, 16
          %s358 = sadd.s32 %s353, %s357
          %s359 = smul.addr %s358, 128
          %s360 = scalar_lea.hbm %s2, %s359
          %s362 = sshll.u32 %s349, 4
          %s363 = int_to_ptr.vmem [resolvable:$true] %s362
          %365 = dma.hbm_to_vmem [thread:$0]  %s360, 128, %s363, %s346
        $region44: #{final_upsample_x4.1} parent=31 // pred_fallthru
          _
      $region32: #{final_upsample_x4.1} parent=5 // pred_fallthru
        _
      %p366 = scmp.le.s32.totalorder 1, %s20
      %p367 = scmp.lt.s32.totalorder %s20, 9
      %p368 = pnand %p366, %p367
      %p369 = pneg %p368
      // Predicated region
      $region45: #{final_upsample_x4.1} parent=5 // pred_check
        _
      $region46: #{final_upsample_x4.1} parent=5 // pred_check_branch
        %371 = sbr.rel (%p368) target = $region48
      $region47: #{final_upsample_x4.1} parent=5 // pred_region
        %s372 = ssub.s32 %s20, 1
        %s373 = sand.u32 %s55, 1
        %s374 = scalar_lea.sflag [#allocation3], %s373
        %s375 = sand.u32 %s55, 1
        %s376 = smul.addr %s375, 8
        %s377 = scalar_lea.vmem [#allocation2], %s376
        // Predicated region
        $region49: #{final_upsample_x4.1} parent=47 // pred_check
          %p378 = pneg %p68
        $region50: #{final_upsample_x4.1} parent=47 // pred_check_branch
          %380 = sbr.rel (%p378) target = $region52
        $region51: #{final_upsample_x4.1} parent=47 // pred_region
          %381 = dma.done %s374, 128
        $region52: #{final_upsample_x4.1} parent=47 // pred_fallthru
          _
        %s382 = sand.u32 %s25, 1
        %s383 = scalar_lea.sflag [#allocation5], %s382
        %s384 = sand.u32 %s83, 1
        %s385 = smul.addr %s384, 32
        %s386 = scalar_lea.vmem [#allocation4], %s385
        // Predicated region
        $region53: #{final_upsample_x4.1} parent=47 // pred_check
          %p387 = pneg %p96
        $region54: #{final_upsample_x4.1} parent=47 // pred_check_branch
          %389 = sbr.rel (%p387) target = $region56
        $region55: #{final_upsample_x4.1} parent=47 // pred_region
          %390 = dma.done %s383, 512
        $region56: #{final_upsample_x4.1} parent=47 // pred_fallthru
          _
        %s391 = sand.u32 %s25, 1
        %s392 = scalar_lea.sflag [#allocation5], %s391
        %s393 = sand.u32 %s119, 1
        %s394 = smul.addr %s393, 8
        %s395 = scalar_lea.vmem [#allocation6], %s394
        // Predicated region
        $region57: #{final_upsample_x4.1} parent=47 // pred_check
          %p396 = pneg %p132
        $region58: #{final_upsample_x4.1} parent=47 // pred_check_branch
          %398 = sbr.rel (%p396) target = $region60
        $region59: #{final_upsample_x4.1} parent=47 // pred_region
          %399 = dma.done %s392, 128
        $region60: #{final_upsample_x4.1} parent=47 // pred_fallthru
          _
        // Predicated region
        $region61: #{final_upsample_x4.1} parent=47 // pred_check
          %p400 = pneg %p153
        $region62: #{final_upsample_x4.1} parent=47 // pred_check_branch
          %402 = sbr.rel (%p400) target = $region64
        $region63: #{final_upsample_x4.1} parent=47 // pred_region
          %403 = dma.done [#allocation8], 512
        $region64: #{final_upsample_x4.1} parent=47 // pred_fallthru
          _
        // Predicated region
        $region65: #{final_upsample_x4.1} parent=47 // pred_check
          %p404 = pneg %p174
        $region66: #{final_upsample_x4.1} parent=47 // pred_check_branch
          %406 = sbr.rel (%p404) target = $region68
        $region67: #{final_upsample_x4.1} parent=47 // pred_region
          %407 = dma.done [#allocation8], 512
        $region68: #{final_upsample_x4.1} parent=47 // pred_fallthru
          _
        %s408 = sand.u32 %s55, 1
        %s409 = scalar_lea.sflag [#allocation3], %s408
        %s410 = sand.u32 %s55, 1
        %s411 = smul.addr %s410, 8
        %s412 = scalar_lea.vmem [#allocation2], %s411
        %p413 = pneg %p68
        %p414 = pneg %p65
        %s415 = sand.u32 %s25, 1
        %s416 = scalar_lea.sflag [#allocation5], %s415
        %s417 = sand.u32 %s83, 1
        %s418 = smul.addr %s417, 32
        %s419 = scalar_lea.vmem [#allocation4], %s418
        %p420 = pneg %p96
        %p421 = pneg %p93
        %s422 = sand.u32 %s25, 1
        %s423 = scalar_lea.sflag [#allocation5], %s422
        %s424 = sand.u32 %s119, 1
        %s425 = smul.addr %s424, 8
        %s426 = scalar_lea.vmem [#allocation6], %s425
        %p427 = pneg %p132
        %p428 = pneg %p129
        %p429 = pneg %p153
        %p430 = pneg %p150
        %p431 = pneg %p174
        %p432 = pneg %p171
        %p433 = pneg %p195
        %p434 = pneg %p192
        %p435 = pneg %p216
        %p436 = pneg %p213
        %p437 = pneg %p244
        %p438 = pneg %p241
        %s439 = smul.u32 16, %s30
        %p440 = scmp.lt.s32.totalorder %s29, 1
        %s441 = scalar_select %p440, %s29, 1
        %p442 = scmp.lt.s32.totalorder %s439, 63
        %s443 = scalar_select %p442, %s439, 63
        %s444 = smul.addr %s441, 64
        %s445 = sadd.s32 %s443, %s444
        %s446 = smul.addr %s445, 8
        %s447 = scalar_lea.vmem %s7, %s446
        %s448 = smul.u32 %s30, 4
        %s449 = ssub.s32 %s448, 1
        %p450 = scmp.gt.s32.totalorder %s449, 0
        %s451 = scalar_select %p450, %s449, 0
        %s452 = smul.u32 4, %s30
        %s453 = sadd.s32 %s30, 1
        %s454 = smul.u32 %s453, 4
        %p455 = scmp.lt.s32.totalorder %s454, 15
        %s456 = scalar_select %p455, %s454, 15
        %s457 = smul.u32 16, %s30
        %p458 = scmp.lt.s32.totalorder %s29, 1
        %s459 = scalar_select %p458, %s29, 1
        %p460 = scmp.lt.s32.totalorder %s457, 63
        %s461 = scalar_select %p460, %s457, 63
        %s462 = smul.addr %s459, 64
        %s463 = sadd.s32 %s461, %s462
        %s464 = smul.addr %s463, 8
        %s465 = scalar_lea.vmem %s7, %s464
        %s466 = smul.u32 16, %s30
        %v467 = vld [vmem:[%s377] sm:$0xff]
        %v468 = vld [vmem:[%s386] sm:$0xff]
        %v469 = vld [vmem:[%s386 + $0x8] sm:$0xff]
        %v470 = vld [vmem:[%s386 + $0x10] sm:$0xff]
        %v471 = vld [vmem:[%s386 + $0x18] sm:$0xff]
        %v472 = vld [vmem:[%s395] sm:$0xff]
        %v473 = vld [vmem:[#allocation7] sm:$0xff]
        %v474 = vld [vmem:[#allocation7 + $0x8] sm:$0xff]
        %v475 = vld [vmem:[#allocation7 + $0x10] sm:$0xff]
        %v476 = vld [vmem:[#allocation7 + $0x18] sm:$0xff]
        %vm477 = vcmask 261120
        %v479 = vsel %vm477, %v467, 0
        %v482 = vsel %vm477, %v468, 0
        %v485 = vsel %vm477, %v469, 0
        %v488 = vsel %vm477, %v470, 0
        %v491 = vsel %vm477, %v471, 0
        %v494 = vsel %vm477, %v472, 0
        %496 = vmatprep.subr.mxu0 0.0
        %497 = vmatpush1.msra.mxu0 0.0
        %498 = vmatprep.subr.mxu0 0.0
        %499 = vmatpush1.msra.mxu0 0.0
        %500 = vmatprep.subr.mxu0 0.0
        %501 = vmatpush1.msra.mxu0 0.0
        %502 = vmatprep.subr.mxu0 0.0
        %503 = vmatpush1.msra.mxu0 0.0
        %504 = vmatprep.subr.mxu0 0.0
        %505 = vmatpush1.msra.mxu0 0.0
        %506 = vmatprep.subr.mxu0 0.0
        %507 = vmatpush1.msra.mxu0 0.0
        %508 = vmatprep.subr.mxu0 0.0
        %509 = vmatpush1.msra.mxu0 0.0
        %510 = vmatprep.subr.mxu0 0.0
        %511 = vmatpush1.msra.mxu0 0.0
        %512 = vmatprep.subr.mxu0 0.0
        %513 = vmatpush1.msra.mxu0 0.0
        %514 = vmatprep.subr.mxu0 0.0
        %515 = vmatpush1.msra.mxu0 0.0
        %516 = vmatprep.subr.mxu0 0.0
        %517 = vmatpush1.msra.mxu0 0.0
        %518 = vmatprep.subr.mxu0 0.0
        %519 = vmatpush1.msra.mxu0 0.0
        %520 = vmatprep.subr.mxu0 0.0
        %521 = vmatpush1.msra.mxu0 %v476
        %522 = vmatprep.subr.mxu0 0.0
        %523 = vmatpush1.msra.mxu0 %v475
        %524 = vmatprep.subr.mxu0 0.0
        %525 = vmatpush1.msra.mxu0 %v474
        %526 = vmatprep.subr.mxu0 0.0
        %527 = vmatpush1.msra.mxu0 %v473
        %528 = vmatprep.subr.mxu0 0.0
        %529 = vmatpush2.msra.mxu0 0.0
        %530 = vmatprep.subr.mxu0 0.0
        %531 = vmatpush2.msra.mxu0 0.0
        %532 = vmatprep.subr.mxu0 0.0
        %533 = vmatpush2.msra.mxu0 0.0
        %534 = vmatprep.subr.mxu0 0.0
        %535 = vmatpush2.msra.mxu0 0.0
        %536 = vmatprep.subr.mxu0 0.0
        %537 = vmatpush2.msra.mxu0 0.0
        %538 = vmatprep.subr.mxu0 0.0
        %539 = vmatpush2.msra.mxu0 0.0
        %540 = vmatprep.subr.mxu0 0.0
        %541 = vmatpush2.msra.mxu0 0.0
        %542 = vmatprep.subr.mxu0 0.0
        %543 = vmatpush2.msra.mxu0 0.0
        %544 = vmatprep.subr.mxu0 0.0
        %545 = vmatpush2.msra.mxu0 0.0
        %546 = vmatprep.subr.mxu0 0.0
        %547 = vmatpush2.msra.mxu0 0.0
        %548 = vmatprep.subr.mxu0 0.0
        %549 = vmatpush2.msra.mxu0 0.0
        %550 = vmatprep.subr.mxu0 0.0
        %551 = vmatpush2.msra.mxu0 0.0
        %552 = vmatprep.subr.mxu0 0.0
        %553 = vmatpush2.msra.mxu0 0.0
        %554 = vmatprep.subr.mxu0 0.0
        %555 = vmatpush2.msra.mxu0 0.0
        %556 = vmatprep.subr.mxu0 0.0
        %557 = vmatpush2.msra.mxu0 0.0
        %558 = vmatprep.subr.mxu0 0.0
        %559 = vmatpush2.msra.mxu0 0.0
        %560 = vmatprep.mubr.f32.mxu0 0.0
        %561 = vmatmul.mubr.f32.gmra.mxu0 %v479
        %v562 = vpop.f32.mrf.mxu0
        %v563 = vadd.f32 0.0, %v562
        %v564 = vpop.f32.mrf.mxu0
        %565 = vmatprep.mubr.f32.mxu0 0.0
        %566 = vmatmul.mubr.f32.gmra.mxu0 %v482
        %v567 = vpop.f32.mrf.mxu0
        %v568 = vadd.f32 0.0, %v567
        %v569 = vpop.f32.mrf.mxu0
        %570 = vmatprep.mubr.f32.mxu0 0.0
        %571 = vmatmul.mubr.f32.gmra.mxu0 %v485
        %v572 = vpop.f32.mrf.mxu0
        %v573 = vadd.f32 0.0, %v572
        %v574 = vpop.f32.mrf.mxu0
        %575 = vmatprep.mubr.f32.mxu0 0.0
        %576 = vmatmul.mubr.f32.gmra.mxu0 %v488
        %v577 = vpop.f32.mrf.mxu0
        %v578 = vadd.f32 0.0, %v577
        %v579 = vpop.f32.mrf.mxu0
        %580 = vmatprep.mubr.f32.mxu0 0.0
        %581 = vmatmul.mubr.f32.gmra.mxu0 %v491
        %v582 = vpop.f32.mrf.mxu0
        %v583 = vadd.f32 0.0, %v582
        %v584 = vpop.f32.mrf.mxu0
        %585 = vmatprep.mubr.f32.mxu0 0.0
        %586 = vmatmul.mubr.f32.gmra.mxu0 %v494
        %v587 = vpop.f32.mrf.mxu0
        %v588 = vadd.f32 0.0, %v587
        %v589 = vpop.f32.mrf.mxu0
        %590 = vdwg.mxu0
        %v591 = vld [vmem:[#allocation9] sm:$0xff]
        %v592 = vld [vmem:[#allocation9 + $0x8] sm:$0xff]
        %v593 = vld [vmem:[#allocation9 + $0x10] sm:$0xff]
        %v594 = vld [vmem:[#allocation9 + $0x18] sm:$0xff]
        %v596 = vsel %vm477, %v563, 0
        %v599 = vsel %vm477, %v568, 0
        %v602 = vsel %vm477, %v573, 0
        %v605 = vsel %vm477, %v578, 0
        %v608 = vsel %vm477, %v583, 0
        %v611 = vsel %vm477, %v588, 0
        %613 = vmatprep.subr.mxu0 0.0
        %614 = vmatpush1.msra.mxu0 0.0
        %615 = vmatprep.subr.mxu0 0.0
        %616 = vmatpush1.msra.mxu0 0.0
        %617 = vmatprep.subr.mxu0 0.0
        %618 = vmatpush1.msra.mxu0 0.0
        %619 = vmatprep.subr.mxu0 0.0
        %620 = vmatpush1.msra.mxu0 0.0
        %621 = vmatprep.subr.mxu0 0.0
        %622 = vmatpush1.msra.mxu0 0.0
        %623 = vmatprep.subr.mxu0 0.0
        %624 = vmatpush1.msra.mxu0 0.0
        %625 = vmatprep.subr.mxu0 0.0
        %626 = vmatpush1.msra.mxu0 0.0
        %627 = vmatprep.subr.mxu0 0.0
        %628 = vmatpush1.msra.mxu0 0.0
        %629 = vmatprep.subr.mxu0 0.0
        %630 = vmatpush1.msra.mxu0 0.0
        %631 = vmatprep.subr.mxu0 0.0
        %632 = vmatpush1.msra.mxu0 0.0
        %633 = vmatprep.subr.mxu0 0.0
        %634 = vmatpush1.msra.mxu0 0.0
        %635 = vmatprep.subr.mxu0 0.0
        %636 = vmatpush1.msra.mxu0 0.0
        %637 = vmatprep.subr.mxu0 0.0
        %638 = vmatpush1.msra.mxu0 %v594
        %639 = vmatprep.subr.mxu0 0.0
        %640 = vmatpush1.msra.mxu0 %v593
        %641 = vmatprep.subr.mxu0 0.0
        %642 = vmatpush1.msra.mxu0 %v592
        %643 = vmatprep.subr.mxu0 0.0
        %644 = vmatpush1.msra.mxu0 %v591
        %645 = vmatprep.subr.mxu0 0.0
        %646 = vmatpush2.msra.mxu0 0.0
        %647 = vmatprep.subr.mxu0 0.0
        %648 = vmatpush2.msra.mxu0 0.0
        %649 = vmatprep.subr.mxu0 0.0
        %650 = vmatpush2.msra.mxu0 0.0
        %651 = vmatprep.subr.mxu0 0.0
        %652 = vmatpush2.msra.mxu0 0.0
        %653 = vmatprep.subr.mxu0 0.0
        %654 = vmatpush2.msra.mxu0 0.0
        %655 = vmatprep.subr.mxu0 0.0
        %656 = vmatpush2.msra.mxu0 0.0
        %657 = vmatprep.subr.mxu0 0.0
        %658 = vmatpush2.msra.mxu0 0.0
        %659 = vmatprep.subr.mxu0 0.0
        %660 = vmatpush2.msra.mxu0 0.0
        %661 = vmatprep.subr.mxu0 0.0
        %662 = vmatpush2.msra.mxu0 0.0
        %663 = vmatprep.subr.mxu0 0.0
        %664 = vmatpush2.msra.mxu0 0.0
        %665 = vmatprep.subr.mxu0 0.0
        %666 = vmatpush2.msra.mxu0 0.0
        %667 = vmatprep.subr.mxu0 0.0
        %668 = vmatpush2.msra.mxu0 0.0
        %669 = vmatprep.subr.mxu0 0.0
        %670 = vmatpush2.msra.mxu0 0.0
        %671 = vmatprep.subr.mxu0 0.0
        %672 = vmatpush2.msra.mxu0 0.0
        %673 = vmatprep.subr.mxu0 0.0
        %674 = vmatpush2.msra.mxu0 0.0
        %675 = vmatprep.subr.mxu0 0.0
        %676 = vmatpush2.msra.mxu0 0.0
        %677 = vmatprep.mubr.f32.mxu0 0.0
        %678 = vmatmul.mubr.f32.gmra.mxu0 %v596
        %v679 = vpop.f32.mrf.mxu0
        %v680 = vadd.f32 0.0, %v679
        %v681 = vpop.f32.mrf.mxu0
        %682 = vmatprep.mubr.f32.mxu0 0.0
        %683 = vmatmul.mubr.f32.gmra.mxu0 %v599
        %v684 = vpop.f32.mrf.mxu0
        %v685 = vadd.f32 0.0, %v684
        %v686 = vpop.f32.mrf.mxu0
        %687 = vmatprep.mubr.f32.mxu0 0.0
        %688 = vmatmul.mubr.f32.gmra.mxu0 %v602
        %v689 = vpop.f32.mrf.mxu0
        %v690 = vadd.f32 0.0, %v689
        %v691 = vpop.f32.mrf.mxu0
        %692 = vmatprep.mubr.f32.mxu0 0.0
        %693 = vmatmul.mubr.f32.gmra.mxu0 %v605
        %v694 = vpop.f32.mrf.mxu0
        %v695 = vadd.f32 0.0, %v694
        %v696 = vpop.f32.mrf.mxu0
        %697 = vmatprep.mubr.f32.mxu0 0.0
        %698 = vmatmul.mubr.f32.gmra.mxu0 %v608
        %v699 = vpop.f32.mrf.mxu0
        %v700 = vadd.f32 0.0, %v699
        %v701 = vpop.f32.mrf.mxu0
        %702 = vmatprep.mubr.f32.mxu0 0.0
        %703 = vmatmul.mubr.f32.gmra.mxu0 %v611
        %v704 = vpop.f32.mrf.mxu0
        %v705 = vadd.f32 0.0, %v704
        %v706 = vpop.f32.mrf.mxu0
        %707 = vdwg.mxu0
        %v708 = vmul.f32 %v680, 0.75
        %v709 = vmul.f32 %v685, 0.75
        %v710 = vmul.f32 %v690, 0.75
        %v711 = vmul.f32 %v695, 0.75
        %v712 = vmul.f32 %v700, 0.75
        %v713 = vmul.f32 %v685, 0.25
        %v714 = vmul.f32 %v690, 0.25
        %v715 = vmul.f32 %v695, 0.25
        %v716 = vmul.f32 %v700, 0.25
        %v717 = vmul.f32 %v705, 0.25
        %v718 = vadd.f32 %v708, %v713
        %v719 = vadd.f32 %v709, %v714
        %v720 = vadd.f32 %v710, %v715
        %v721 = vadd.f32 %v711, %v716
        %v722 = vadd.f32 %v712, %v717
        %v723 = vmul.f32 %v680, 0.25
        %v724 = vmul.f32 %v705, 0.75
        %v725 = vadd.f32 %v723, %v709
        %v726 = vadd.f32 %v713, %v710
        %v727 = vadd.f32 %v714, %v711
        %v728 = vadd.f32 %v715, %v712
        %v729 = vadd.f32 %v716, %v724
        %v740 = vrot.slane %v718, 7
        %v741 = vrot.slane %v725, 7
        %v742 = vrot.slane %v719, 7
        %v743 = vrot.slane %v726, 7
        %v744 = vrot.slane %v720, 7
        %v745 = vrot.slane %v727, 7
        %v746 = vrot.slane %v721, 7
        %v747 = vrot.slane %v728, 7
        %v748 = vrot.slane %v722, 7
        %v749 = vrot.slane %v729, 7
        %vm760 = vcmask 1040384
        %v761 = vsel %vm760, %v718, %v740
        %v762 = vsel %vm760, %v725, %v741
        %v763 = vsel %vm760, %v719, %v742
        %v764 = vsel %vm760, %v726, %v743
        %v765 = vsel %vm760, %v720, %v744
        %v766 = vsel %vm760, %v727, %v745
        %v767 = vsel %vm760, %v721, %v746
        %v768 = vsel %vm760, %v728, %v747
        %v769 = vsel %vm760, %v722, %v748
        %v770 = vsel %vm760, %v729, %v749
        %v771 = vrot.slane %v718, 1
        %v772 = vrot.slane %v725, 1
        %v773 = vrot.slane %v719, 1
        %v774 = vrot.slane %v726, 1
        %v775 = vrot.slane %v720, 1
        %v776 = vrot.slane %v727, 1
        %v777 = vrot.slane %v721, 1
        %v778 = vrot.slane %v728, 1
        %v779 = vrot.slane %v722, 1
        %v780 = vrot.slane %v729, 1
        %vm791 = vcmask 1046528
        %v792 = vsel %vm791, %v771, %v718
        %v793 = vsel %vm791, %v772, %v725
        %v794 = vsel %vm791, %v773, %v719
        %v795 = vsel %vm791, %v774, %v726
        %v796 = vsel %vm791, %v775, %v720
        %v797 = vsel %vm791, %v776, %v727
        %v798 = vsel %vm791, %v777, %v721
        %v799 = vsel %vm791, %v778, %v728
        %v800 = vsel %vm791, %v779, %v722
        %v801 = vsel %vm791, %v780, %v729
        %v802 = vmul.f32 %v761, 0.25
        %v803 = vmul.f32 %v762, 0.25
        %v804 = vmul.f32 %v763, 0.25
        %v805 = vmul.f32 %v764, 0.25
        %v806 = vmul.f32 %v765, 0.25
        %v807 = vmul.f32 %v766, 0.25
        %v808 = vmul.f32 %v767, 0.25
        %v809 = vmul.f32 %v768, 0.25
        %v810 = vmul.f32 %v769, 0.25
        %v811 = vmul.f32 %v770, 0.25
        %v812 = vmul.f32 %v718, 0.75
        %v813 = vmul.f32 %v725, 0.75
        %v814 = vmul.f32 %v719, 0.75
        %v815 = vmul.f32 %v726, 0.75
        %v816 = vmul.f32 %v720, 0.75
        %v817 = vmul.f32 %v727, 0.75
        %v818 = vmul.f32 %v721, 0.75
        %v819 = vmul.f32 %v728, 0.75
        %v820 = vmul.f32 %v722, 0.75
        %v821 = vmul.f32 %v729, 0.75
        %v822 = vadd.f32 %v802, %v812
        %v823 = vadd.f32 %v803, %v813
        %v824 = vadd.f32 %v804, %v814
        %v825 = vadd.f32 %v805, %v815
        %v826 = vadd.f32 %v806, %v816
        %v827 = vadd.f32 %v807, %v817
        %v828 = vadd.f32 %v808, %v818
        %v829 = vadd.f32 %v809, %v819
        %v830 = vadd.f32 %v810, %v820
        %v831 = vadd.f32 %v811, %v821
        %v832 = vmul.f32 %v792, 0.25
        %v833 = vmul.f32 %v793, 0.25
        %v834 = vmul.f32 %v794, 0.25
        %v835 = vmul.f32 %v795, 0.25
        %v836 = vmul.f32 %v796, 0.25
        %v837 = vmul.f32 %v797, 0.25
        %v838 = vmul.f32 %v798, 0.25
        %v839 = vmul.f32 %v799, 0.25
        %v840 = vmul.f32 %v800, 0.25
        %v841 = vmul.f32 %v801, 0.25
        %v842 = vadd.f32 %v812, %v832
        %v843 = vadd.f32 %v813, %v833
        %v844 = vadd.f32 %v814, %v834
        %v845 = vadd.f32 %v815, %v835
        %v846 = vadd.f32 %v816, %v836
        %v847 = vadd.f32 %v817, %v837
        %v848 = vadd.f32 %v818, %v838
        %v849 = vadd.f32 %v819, %v839
        %v850 = vadd.f32 %v820, %v840
        %v851 = vadd.f32 %v821, %v841
        %v852 = vmul.f32 %v822, 0.25
        %v853 = vmul.f32 %v823, 0.25
        %v854 = vmul.f32 %v824, 0.25
        %v855 = vmul.f32 %v825, 0.25
        %v856 = vmul.f32 %v826, 0.25
        %v857 = vmul.f32 %v827, 0.25
        %v858 = vmul.f32 %v828, 0.25
        %v859 = vmul.f32 %v829, 0.25
        %v860 = vmul.f32 %v823, 0.75
        %v861 = vmul.f32 %v824, 0.75
        %v862 = vmul.f32 %v825, 0.75
        %v863 = vmul.f32 %v826, 0.75
        %v864 = vmul.f32 %v827, 0.75
        %v865 = vmul.f32 %v828, 0.75
        %v866 = vmul.f32 %v829, 0.75
        %v867 = vmul.f32 %v830, 0.75
        %v868 = vadd.f32 %v852, %v860
        %v869 = vadd.f32 %v853, %v861
        %v870 = vadd.f32 %v854, %v862
        %v871 = vadd.f32 %v855, %v863
        %v872 = vadd.f32 %v856, %v864
        %v873 = vadd.f32 %v857, %v865
        %v874 = vadd.f32 %v858, %v866
        %v875 = vadd.f32 %v859, %v867
        %v876 = vmul.f32 %v830, 0.25
        %v877 = vmul.f32 %v831, 0.25
        %v878 = vadd.f32 %v860, %v854
        %v879 = vadd.f32 %v861, %v855
        %v880 = vadd.f32 %v862, %v856
        %v881 = vadd.f32 %v863, %v857
        %v882 = vadd.f32 %v864, %v858
        %v883 = vadd.f32 %v865, %v859
        %v884 = vadd.f32 %v866, %v876
        %v885 = vadd.f32 %v867, %v877
        %v886 = vmul.f32 %v842, 0.25
        %v887 = vmul.f32 %v843, 0.25
        %v888 = vmul.f32 %v844, 0.25
        %v889 = vmul.f32 %v845, 0.25
        %v890 = vmul.f32 %v846, 0.25
        %v891 = vmul.f32 %v847, 0.25
        %v892 = vmul.f32 %v848, 0.25
        %v893 = vmul.f32 %v849, 0.25
        %v894 = vmul.f32 %v843, 0.75
        %v895 = vmul.f32 %v844, 0.75
        %v896 = vmul.f32 %v845, 0.75
        %v897 = vmul.f32 %v846, 0.75
        %v898 = vmul.f32 %v847, 0.75
        %v899 = vmul.f32 %v848, 0.75
        %v900 = vmul.f32 %v849, 0.75
        %v901 = vmul.f32 %v850, 0.75
        %v902 = vadd.f32 %v886, %v894
        %v903 = vadd.f32 %v887, %v895
        %v904 = vadd.f32 %v888, %v896
        %v905 = vadd.f32 %v889, %v897
        %v906 = vadd.f32 %v890, %v898
        %v907 = vadd.f32 %v891, %v899
        %v908 = vadd.f32 %v892, %v900
        %v909 = vadd.f32 %v893, %v901
        %v910 = vmul.f32 %v850, 0.25
        %v911 = vmul.f32 %v851, 0.25
        %v912 = vadd.f32 %v894, %v888
        %v913 = vadd.f32 %v895, %v889
        %v914 = vadd.f32 %v896, %v890
        %v915 = vadd.f32 %v897, %v891
        %v916 = vadd.f32 %v898, %v892
        %v917 = vadd.f32 %v899, %v893
        %v918 = vadd.f32 %v900, %v910
        %v919 = vadd.f32 %v901, %v911
        %v936 = vrot.slane %v902, 7
        %v937 = vrot.slane %v912, 7
        %v938 = vrot.slane %v903, 7
        %v939 = vrot.slane %v913, 7
        %v940 = vrot.slane %v904, 7
        %v941 = vrot.slane %v914, 7
        %v942 = vrot.slane %v905, 7
        %v943 = vrot.slane %v915, 7
        %v944 = vrot.slane %v906, 7
        %v945 = vrot.slane %v916, 7
        %v946 = vrot.slane %v907, 7
        %v947 = vrot.slane %v917, 7
        %v948 = vrot.slane %v908, 7
        %v949 = vrot.slane %v918, 7
        %v950 = vrot.slane %v909, 7
        %v951 = vrot.slane %v919, 7
        %v968 = vsel %vm760, %v868, %v936
        %v969 = vsel %vm760, %v878, %v937
        %v970 = vsel %vm760, %v869, %v938
        %v971 = vsel %vm760, %v879, %v939
        %v972 = vsel %vm760, %v870, %v940
        %v973 = vsel %vm760, %v880, %v941
        %v974 = vsel %vm760, %v871, %v942
        %v975 = vsel %vm760, %v881, %v943
        %v976 = vsel %vm760, %v872, %v944
        %v977 = vsel %vm760, %v882, %v945
        %v978 = vsel %vm760, %v873, %v946
        %v979 = vsel %vm760, %v883, %v947
        %v980 = vsel %vm760, %v874, %v948
        %v981 = vsel %vm760, %v884, %v949
        %v982 = vsel %vm760, %v875, %v950
        %v983 = vsel %vm760, %v885, %v951
        %v1000 = vrot.slane %v868, 1
        %v1001 = vrot.slane %v878, 1
        %v1002 = vrot.slane %v869, 1
        %v1003 = vrot.slane %v879, 1
        %v1004 = vrot.slane %v870, 1
        %v1005 = vrot.slane %v880, 1
        %v1006 = vrot.slane %v871, 1
        %v1007 = vrot.slane %v881, 1
        %v1008 = vrot.slane %v872, 1
        %v1009 = vrot.slane %v882, 1
        %v1010 = vrot.slane %v873, 1
        %v1011 = vrot.slane %v883, 1
        %v1012 = vrot.slane %v874, 1
        %v1013 = vrot.slane %v884, 1
        %v1014 = vrot.slane %v875, 1
        %v1015 = vrot.slane %v885, 1
        %v1032 = vsel %vm791, %v1000, %v902
        %v1033 = vsel %vm791, %v1001, %v912
        %v1034 = vsel %vm791, %v1002, %v903
        %v1035 = vsel %vm791, %v1003, %v913
        %v1036 = vsel %vm791, %v1004, %v904
        %v1037 = vsel %vm791, %v1005, %v914
        %v1038 = vsel %vm791, %v1006, %v905
        %v1039 = vsel %vm791, %v1007, %v915
        %v1040 = vsel %vm791, %v1008, %v906
        %v1041 = vsel %vm791, %v1009, %v916
        %v1042 = vsel %vm791, %v1010, %v907
        %v1043 = vsel %vm791, %v1011, %v917
        %v1044 = vsel %vm791, %v1012, %v908
        %v1045 = vsel %vm791, %v1013, %v918
        %v1046 = vsel %vm791, %v1014, %v909
        %v1047 = vsel %vm791, %v1015, %v919
        %v1048 = vmul.f32 %v968, 0.25
        %v1049 = vmul.f32 %v969, 0.25
        %v1050 = vmul.f32 %v970, 0.25
        %v1051 = vmul.f32 %v971, 0.25
        %v1052 = vmul.f32 %v972, 0.25
        %v1053 = vmul.f32 %v973, 0.25
        %v1054 = vmul.f32 %v974, 0.25
        %v1055 = vmul.f32 %v975, 0.25
        %v1056 = vmul.f32 %v976, 0.25
        %v1057 = vmul.f32 %v977, 0.25
        %v1058 = vmul.f32 %v978, 0.25
        %v1059 = vmul.f32 %v979, 0.25
        %v1060 = vmul.f32 %v980, 0.25
        %v1061 = vmul.f32 %v981, 0.25
        %v1062 = vmul.f32 %v982, 0.25
        %v1063 = vmul.f32 %v983, 0.25
        %v1064 = vmul.f32 %v868, 0.75
        %v1065 = vmul.f32 %v878, 0.75
        %v1066 = vmul.f32 %v869, 0.75
        %v1067 = vmul.f32 %v879, 0.75
        %v1068 = vmul.f32 %v870, 0.75
        %v1069 = vmul.f32 %v880, 0.75
        %v1070 = vmul.f32 %v871, 0.75
        %v1071 = vmul.f32 %v881, 0.75
        %v1072 = vmul.f32 %v872, 0.75
        %v1073 = vmul.f32 %v882, 0.75
        %v1074 = vmul.f32 %v873, 0.75
        %v1075 = vmul.f32 %v883, 0.75
        %v1076 = vmul.f32 %v874, 0.75
        %v1077 = vmul.f32 %v884, 0.75
        %v1078 = vmul.f32 %v875, 0.75
        %v1079 = vmul.f32 %v885, 0.75
        %v1080 = vadd.f32 %v1048, %v1064
        %v1081 = vadd.f32 %v1049, %v1065
        %v1082 = vadd.f32 %v1050, %v1066
        %v1083 = vadd.f32 %v1051, %v1067
        %v1084 = vadd.f32 %v1052, %v1068
        %v1085 = vadd.f32 %v1053, %v1069
        %v1086 = vadd.f32 %v1054, %v1070
        %v1087 = vadd.f32 %v1055, %v1071
        %v1088 = vadd.f32 %v1056, %v1072
        %v1089 = vadd.f32 %v1057, %v1073
        %v1090 = vadd.f32 %v1058, %v1074
        %v1091 = vadd.f32 %v1059, %v1075
        %v1092 = vadd.f32 %v1060, %v1076
        %v1093 = vadd.f32 %v1061, %v1077
        %v1094 = vadd.f32 %v1062, %v1078
        %v1095 = vadd.f32 %v1063, %v1079
        %v1096 = vmul.f32 %v902, 0.25
        %v1097 = vmul.f32 %v912, 0.25
        %v1098 = vmul.f32 %v903, 0.25
        %v1099 = vmul.f32 %v913, 0.25
        %v1100 = vmul.f32 %v904, 0.25
        %v1101 = vmul.f32 %v914, 0.25
        %v1102 = vmul.f32 %v905, 0.25
        %v1103 = vmul.f32 %v915, 0.25
        %v1104 = vmul.f32 %v906, 0.25
        %v1105 = vmul.f32 %v916, 0.25
        %v1106 = vmul.f32 %v907, 0.25
        %v1107 = vmul.f32 %v917, 0.25
        %v1108 = vmul.f32 %v908, 0.25
        %v1109 = vmul.f32 %v918, 0.25
        %v1110 = vmul.f32 %v909, 0.25
        %v1111 = vmul.f32 %v919, 0.25
        %v1112 = vadd.f32 %v1064, %v1096
        %v1113 = vadd.f32 %v1065, %v1097
        %v1114 = vadd.f32 %v1066, %v1098
        %v1115 = vadd.f32 %v1067, %v1099
        %v1116 = vadd.f32 %v1068, %v1100
        %v1117 = vadd.f32 %v1069, %v1101
        %v1118 = vadd.f32 %v1070, %v1102
        %v1119 = vadd.f32 %v1071, %v1103
        %v1120 = vadd.f32 %v1072, %v1104
        %v1121 = vadd.f32 %v1073, %v1105
        %v1122 = vadd.f32 %v1074, %v1106
        %v1123 = vadd.f32 %v1075, %v1107
        %v1124 = vadd.f32 %v1076, %v1108
        %v1125 = vadd.f32 %v1077, %v1109
        %v1126 = vadd.f32 %v1078, %v1110
        %v1127 = vadd.f32 %v1079, %v1111
        %v1128 = vmul.f32 %v868, 0.25
        %v1129 = vmul.f32 %v878, 0.25
        %v1130 = vmul.f32 %v869, 0.25
        %v1131 = vmul.f32 %v879, 0.25
        %v1132 = vmul.f32 %v870, 0.25
        %v1133 = vmul.f32 %v880, 0.25
        %v1134 = vmul.f32 %v871, 0.25
        %v1135 = vmul.f32 %v881, 0.25
        %v1136 = vmul.f32 %v872, 0.25
        %v1137 = vmul.f32 %v882, 0.25
        %v1138 = vmul.f32 %v873, 0.25
        %v1139 = vmul.f32 %v883, 0.25
        %v1140 = vmul.f32 %v874, 0.25
        %v1141 = vmul.f32 %v884, 0.25
        %v1142 = vmul.f32 %v875, 0.25
        %v1143 = vmul.f32 %v885, 0.25
        %v1144 = vmul.f32 %v902, 0.75
        %v1145 = vmul.f32 %v912, 0.75
        %v1146 = vmul.f32 %v903, 0.75
        %v1147 = vmul.f32 %v913, 0.75
        %v1148 = vmul.f32 %v904, 0.75
        %v1149 = vmul.f32 %v914, 0.75
        %v1150 = vmul.f32 %v905, 0.75
        %v1151 = vmul.f32 %v915, 0.75
        %v1152 = vmul.f32 %v906, 0.75
        %v1153 = vmul.f32 %v916, 0.75
        %v1154 = vmul.f32 %v907, 0.75
        %v1155 = vmul.f32 %v917, 0.75
        %v1156 = vmul.f32 %v908, 0.75
        %v1157 = vmul.f32 %v918, 0.75
        %v1158 = vmul.f32 %v909, 0.75
        %v1159 = vmul.f32 %v919, 0.75
        %v1160 = vadd.f32 %v1128, %v1144
        %v1161 = vadd.f32 %v1129, %v1145
        %v1162 = vadd.f32 %v1130, %v1146
        %v1163 = vadd.f32 %v1131, %v1147
        %v1164 = vadd.f32 %v1132, %v1148
        %v1165 = vadd.f32 %v1133, %v1149
        %v1166 = vadd.f32 %v1134, %v1150
        %v1167 = vadd.f32 %v1135, %v1151
        %v1168 = vadd.f32 %v1136, %v1152
        %v1169 = vadd.f32 %v1137, %v1153
        %v1170 = vadd.f32 %v1138, %v1154
        %v1171 = vadd.f32 %v1139, %v1155
        %v1172 = vadd.f32 %v1140, %v1156
        %v1173 = vadd.f32 %v1141, %v1157
        %v1174 = vadd.f32 %v1142, %v1158
        %v1175 = vadd.f32 %v1143, %v1159
        %v1176 = vmul.f32 %v1032, 0.25
        %v1177 = vmul.f32 %v1033, 0.25
        %v1178 = vmul.f32 %v1034, 0.25
        %v1179 = vmul.f32 %v1035, 0.25
        %v1180 = vmul.f32 %v1036, 0.25
        %v1181 = vmul.f32 %v1037, 0.25
        %v1182 = vmul.f32 %v1038, 0.25
        %v1183 = vmul.f32 %v1039, 0.25
        %v1184 = vmul.f32 %v1040, 0.25
        %v1185 = vmul.f32 %v1041, 0.25
        %v1186 = vmul.f32 %v1042, 0.25
        %v1187 = vmul.f32 %v1043, 0.25
        %v1188 = vmul.f32 %v1044, 0.25
        %v1189 = vmul.f32 %v1045, 0.25
        %v1190 = vmul.f32 %v1046, 0.25
        %v1191 = vmul.f32 %v1047, 0.25
        %v1192 = vadd.f32 %v1144, %v1176
        %v1193 = vadd.f32 %v1145, %v1177
        %v1194 = vadd.f32 %v1146, %v1178
        %v1195 = vadd.f32 %v1147, %v1179
        %v1196 = vadd.f32 %v1148, %v1180
        %v1197 = vadd.f32 %v1149, %v1181
        %v1198 = vadd.f32 %v1150, %v1182
        %v1199 = vadd.f32 %v1151, %v1183
        %v1200 = vadd.f32 %v1152, %v1184
        %v1201 = vadd.f32 %v1153, %v1185
        %v1202 = vadd.f32 %v1154, %v1186
        %v1203 = vadd.f32 %v1155, %v1187
        %v1204 = vadd.f32 %v1156, %v1188
        %v1205 = vadd.f32 %v1157, %v1189
        %v1206 = vadd.f32 %v1158, %v1190
        %v1207 = vadd.f32 %v1159, %v1191
        %v1208 = vsel %vm477, %v1080, 0.0
        %1209 = vadd.xlane.f32.xlu0 %v1208
        %v1210 = vpop.xlane.xlu0 %1209
        %v1211 = vsel %vm477, %v1081, 0.0
        %1212 = vadd.xlane.f32.xlu0 %v1211
        %v1213 = vpop.xlane.xlu0 %1212
        %v1214 = vsel %vm477, %v1082, 0.0
        %1215 = vadd.xlane.f32.xlu0 %v1214
        %v1216 = vpop.xlane.xlu0 %1215
        %v1217 = vsel %vm477, %v1083, 0.0
        %1218 = vadd.xlane.f32.xlu0 %v1217
        %v1219 = vpop.xlane.xlu0 %1218
        %v1220 = vsel %vm477, %v1084, 0.0
        %1221 = vadd.xlane.f32.xlu0 %v1220
        %v1222 = vpop.xlane.xlu0 %1221
        %v1223 = vsel %vm477, %v1085, 0.0
        %1224 = vadd.xlane.f32.xlu0 %v1223
        %v1225 = vpop.xlane.xlu0 %1224
        %v1226 = vsel %vm477, %v1086, 0.0
        %1227 = vadd.xlane.f32.xlu0 %v1226
        %v1228 = vpop.xlane.xlu0 %1227
        %v1229 = vsel %vm477, %v1087, 0.0
        %1230 = vadd.xlane.f32.xlu0 %v1229
        %v1231 = vpop.xlane.xlu0 %1230
        %v1232 = vsel %vm477, %v1088, 0.0
        %1233 = vadd.xlane.f32.xlu0 %v1232
        %v1234 = vpop.xlane.xlu0 %1233
        %v1235 = vsel %vm477, %v1089, 0.0
        %1236 = vadd.xlane.f32.xlu0 %v1235
        %v1237 = vpop.xlane.xlu0 %1236
        %v1238 = vsel %vm477, %v1090, 0.0
        %1239 = vadd.xlane.f32.xlu0 %v1238
        %v1240 = vpop.xlane.xlu0 %1239
        %v1241 = vsel %vm477, %v1091, 0.0
        %1242 = vadd.xlane.f32.xlu0 %v1241
        %v1243 = vpop.xlane.xlu0 %1242
        %v1244 = vsel %vm477, %v1092, 0.0
        %1245 = vadd.xlane.f32.xlu0 %v1244
        %v1246 = vpop.xlane.xlu0 %1245
        %v1247 = vsel %vm477, %v1093, 0.0
        %1248 = vadd.xlane.f32.xlu0 %v1247
        %v1249 = vpop.xlane.xlu0 %1248
        %v1250 = vsel %vm477, %v1094, 0.0
        %1251 = vadd.xlane.f32.xlu0 %v1250
        %v1252 = vpop.xlane.xlu0 %1251
        %v1253 = vsel %vm477, %v1095, 0.0
        %1254 = vadd.xlane.f32.xlu0 %v1253
        %v1255 = vpop.xlane.xlu0 %1254
        %v1256 = vsel %vm477, %v1112, 0.0
        %1257 = vadd.xlane.f32.xlu0 %v1256
        %v1258 = vpop.xlane.xlu0 %1257
        %v1259 = vsel %vm477, %v1113, 0.0
        %1260 = vadd.xlane.f32.xlu0 %v1259
        %v1261 = vpop.xlane.xlu0 %1260
        %v1262 = vsel %vm477, %v1114, 0.0
        %1263 = vadd.xlane.f32.xlu0 %v1262
        %v1264 = vpop.xlane.xlu0 %1263
        %v1265 = vsel %vm477, %v1115, 0.0
        %1266 = vadd.xlane.f32.xlu0 %v1265
        %v1267 = vpop.xlane.xlu0 %1266
        %v1268 = vsel %vm477, %v1116, 0.0
        %1269 = vadd.xlane.f32.xlu0 %v1268
        %v1270 = vpop.xlane.xlu0 %1269
        %v1271 = vsel %vm477, %v1117, 0.0
        %1272 = vadd.xlane.f32.xlu0 %v1271
        %v1273 = vpop.xlane.xlu0 %1272
        %v1274 = vsel %vm477, %v1118, 0.0
        %1275 = vadd.xlane.f32.xlu0 %v1274
        %v1276 = vpop.xlane.xlu0 %1275
        %v1277 = vsel %vm477, %v1119, 0.0
        %1278 = vadd.xlane.f32.xlu0 %v1277
        %v1279 = vpop.xlane.xlu0 %1278
        %v1280 = vsel %vm477, %v1120, 0.0
        %1281 = vadd.xlane.f32.xlu0 %v1280
        %v1282 = vpop.xlane.xlu0 %1281
        %v1283 = vsel %vm477, %v1121, 0.0
        %1284 = vadd.xlane.f32.xlu0 %v1283
        %v1285 = vpop.xlane.xlu0 %1284
        %v1286 = vsel %vm477, %v1122, 0.0
        %1287 = vadd.xlane.f32.xlu0 %v1286
        %v1288 = vpop.xlane.xlu0 %1287
        %v1289 = vsel %vm477, %v1123, 0.0
        %1290 = vadd.xlane.f32.xlu0 %v1289
        %v1291 = vpop.xlane.xlu0 %1290
        %v1292 = vsel %vm477, %v1124, 0.0
        %1293 = vadd.xlane.f32.xlu0 %v1292
        %v1294 = vpop.xlane.xlu0 %1293
        %v1295 = vsel %vm477, %v1125, 0.0
        %1296 = vadd.xlane.f32.xlu0 %v1295
        %v1297 = vpop.xlane.xlu0 %1296
        %v1298 = vsel %vm477, %v1126, 0.0
        %1299 = vadd.xlane.f32.xlu0 %v1298
        %v1300 = vpop.xlane.xlu0 %1299
        %v1301 = vsel %vm477, %v1127, 0.0
        %1302 = vadd.xlane.f32.xlu0 %v1301
        %v1303 = vpop.xlane.xlu0 %1302
        %v1304 = vsel %vm477, %v1160, 0.0
        %1305 = vadd.xlane.f32.xlu0 %v1304
        %v1306 = vpop.xlane.xlu0 %1305
        %v1307 = vsel %vm477, %v1161, 0.0
        %1308 = vadd.xlane.f32.xlu0 %v1307
        %v1309 = vpop.xlane.xlu0 %1308
        %v1310 = vsel %vm477, %v1162, 0.0
        %1311 = vadd.xlane.f32.xlu0 %v1310
        %v1312 = vpop.xlane.xlu0 %1311
        %v1313 = vsel %vm477, %v1163, 0.0
        %1314 = vadd.xlane.f32.xlu0 %v1313
        %v1315 = vpop.xlane.xlu0 %1314
        %v1316 = vsel %vm477, %v1164, 0.0
        %1317 = vadd.xlane.f32.xlu0 %v1316
        %v1318 = vpop.xlane.xlu0 %1317
        %v1319 = vsel %vm477, %v1165, 0.0
        %1320 = vadd.xlane.f32.xlu0 %v1319
        %v1321 = vpop.xlane.xlu0 %1320
        %v1322 = vsel %vm477, %v1166, 0.0
        %1323 = vadd.xlane.f32.xlu0 %v1322
        %v1324 = vpop.xlane.xlu0 %1323
        %v1325 = vsel %vm477, %v1167, 0.0
        %1326 = vadd.xlane.f32.xlu0 %v1325
        %v1327 = vpop.xlane.xlu0 %1326
        %v1328 = vsel %vm477, %v1168, 0.0
        %1329 = vadd.xlane.f32.xlu0 %v1328
        %v1330 = vpop.xlane.xlu0 %1329
        %v1331 = vsel %vm477, %v1169, 0.0
        %1332 = vadd.xlane.f32.xlu0 %v1331
        %v1333 = vpop.xlane.xlu0 %1332
        %v1334 = vsel %vm477, %v1170, 0.0
        %1335 = vadd.xlane.f32.xlu0 %v1334
        %v1336 = vpop.xlane.xlu0 %1335
        %v1337 = vsel %vm477, %v1171, 0.0
        %1338 = vadd.xlane.f32.xlu0 %v1337
        %v1339 = vpop.xlane.xlu0 %1338
        %v1340 = vsel %vm477, %v1172, 0.0
        %1341 = vadd.xlane.f32.xlu0 %v1340
        %v1342 = vpop.xlane.xlu0 %1341
        %v1343 = vsel %vm477, %v1173, 0.0
        %1344 = vadd.xlane.f32.xlu0 %v1343
        %v1345 = vpop.xlane.xlu0 %1344
        %v1346 = vsel %vm477, %v1174, 0.0
        %1347 = vadd.xlane.f32.xlu0 %v1346
        %v1348 = vpop.xlane.xlu0 %1347
        %v1349 = vsel %vm477, %v1175, 0.0
        %1350 = vadd.xlane.f32.xlu0 %v1349
        %v1351 = vpop.xlane.xlu0 %1350
        %v1352 = vsel %vm477, %v1192, 0.0
        %1353 = vadd.xlane.f32.xlu0 %v1352
        %v1354 = vpop.xlane.xlu0 %1353
        %v1355 = vsel %vm477, %v1193, 0.0
        %1356 = vadd.xlane.f32.xlu0 %v1355
        %v1357 = vpop.xlane.xlu0 %1356
        %v1358 = vsel %vm477, %v1194, 0.0
        %1359 = vadd.xlane.f32.xlu0 %v1358
        %v1360 = vpop.xlane.xlu0 %1359
        %v1361 = vsel %vm477, %v1195, 0.0
        %1362 = vadd.xlane.f32.xlu0 %v1361
        %v1363 = vpop.xlane.xlu0 %1362
        %v1364 = vsel %vm477, %v1196, 0.0
        %1365 = vadd.xlane.f32.xlu0 %v1364
        %v1366 = vpop.xlane.xlu0 %1365
        %v1367 = vsel %vm477, %v1197, 0.0
        %1368 = vadd.xlane.f32.xlu0 %v1367
        %v1369 = vpop.xlane.xlu0 %1368
        %v1370 = vsel %vm477, %v1198, 0.0
        %1371 = vadd.xlane.f32.xlu0 %v1370
        %v1372 = vpop.xlane.xlu0 %1371
        %v1373 = vsel %vm477, %v1199, 0.0
        %1374 = vadd.xlane.f32.xlu0 %v1373
        %v1375 = vpop.xlane.xlu0 %1374
        %v1376 = vsel %vm477, %v1200, 0.0
        %1377 = vadd.xlane.f32.xlu0 %v1376
        %v1378 = vpop.xlane.xlu0 %1377
        %v1379 = vsel %vm477, %v1201, 0.0
        %1380 = vadd.xlane.f32.xlu0 %v1379
        %v1381 = vpop.xlane.xlu0 %1380
        %v1382 = vsel %vm477, %v1202, 0.0
        %1383 = vadd.xlane.f32.xlu0 %v1382
        %v1384 = vpop.xlane.xlu0 %1383
        %v1385 = vsel %vm477, %v1203, 0.0
        %1386 = vadd.xlane.f32.xlu0 %v1385
        %v1387 = vpop.xlane.xlu0 %1386
        %v1388 = vsel %vm477, %v1204, 0.0
        %1389 = vadd.xlane.f32.xlu0 %v1388
        %v1390 = vpop.xlane.xlu0 %1389
        %v1391 = vsel %vm477, %v1205, 0.0
        %1392 = vadd.xlane.f32.xlu0 %v1391
        %v1393 = vpop.xlane.xlu0 %1392
        %v1394 = vsel %vm477, %v1206, 0.0
        %1395 = vadd.xlane.f32.xlu0 %v1394
        %v1396 = vpop.xlane.xlu0 %1395
        %v1397 = vsel %vm477, %v1207, 0.0
        %1398 = vadd.xlane.f32.xlu0 %v1397
        %v1399 = vpop.xlane.xlu0 %1398
        %v1400 = vrcp.pop 32.0
        %v1401 = vmul.f32 %v1210, %v1400
        %v1402 = vmul.f32 %v1213, %v1400
        %v1403 = vmul.f32 %v1216, %v1400
        %v1404 = vmul.f32 %v1219, %v1400
        %v1405 = vmul.f32 %v1222, %v1400
        %v1406 = vmul.f32 %v1225, %v1400
        %v1407 = vmul.f32 %v1228, %v1400
        %v1408 = vmul.f32 %v1231, %v1400
        %v1409 = vmul.f32 %v1234, %v1400
        %v1410 = vmul.f32 %v1237, %v1400
        %v1411 = vmul.f32 %v1240, %v1400
        %v1412 = vmul.f32 %v1243, %v1400
        %v1413 = vmul.f32 %v1246, %v1400
        %v1414 = vmul.f32 %v1249, %v1400
        %v1415 = vmul.f32 %v1252, %v1400
        %v1416 = vmul.f32 %v1255, %v1400
        %v1417 = vmul.f32 %v1258, %v1400
        %v1418 = vmul.f32 %v1261, %v1400
        %v1419 = vmul.f32 %v1264, %v1400
        %v1420 = vmul.f32 %v1267, %v1400
        %v1421 = vmul.f32 %v1270, %v1400
        %v1422 = vmul.f32 %v1273, %v1400
        %v1423 = vmul.f32 %v1276, %v1400
        %v1424 = vmul.f32 %v1279, %v1400
        %v1425 = vmul.f32 %v1282, %v1400
        %v1426 = vmul.f32 %v1285, %v1400
        %v1427 = vmul.f32 %v1288, %v1400
        %v1428 = vmul.f32 %v1291, %v1400
        %v1429 = vmul.f32 %v1294, %v1400
        %v1430 = vmul.f32 %v1297, %v1400
        %v1431 = vmul.f32 %v1300, %v1400
        %v1432 = vmul.f32 %v1303, %v1400
        %v1433 = vmul.f32 %v1306, %v1400
        %v1434 = vmul.f32 %v1309, %v1400
        %v1435 = vmul.f32 %v1312, %v1400
        %v1436 = vmul.f32 %v1315, %v1400
        %v1437 = vmul.f32 %v1318, %v1400
        %v1438 = vmul.f32 %v1321, %v1400
        %v1439 = vmul.f32 %v1324, %v1400
        %v1440 = vmul.f32 %v1327, %v1400
        %v1441 = vmul.f32 %v1330, %v1400
        %v1442 = vmul.f32 %v1333, %v1400
        %v1443 = vmul.f32 %v1336, %v1400
        %v1444 = vmul.f32 %v1339, %v1400
        %v1445 = vmul.f32 %v1342, %v1400
        %v1446 = vmul.f32 %v1345, %v1400
        %v1447 = vmul.f32 %v1348, %v1400
        %v1448 = vmul.f32 %v1351, %v1400
        %v1449 = vmul.f32 %v1354, %v1400
        %v1450 = vmul.f32 %v1357, %v1400
        %v1451 = vmul.f32 %v1360, %v1400
        %v1452 = vmul.f32 %v1363, %v1400
        %v1453 = vmul.f32 %v1366, %v1400
        %v1454 = vmul.f32 %v1369, %v1400
        %v1455 = vmul.f32 %v1372, %v1400
        %v1456 = vmul.f32 %v1375, %v1400
        %v1457 = vmul.f32 %v1378, %v1400
        %v1458 = vmul.f32 %v1381, %v1400
        %v1459 = vmul.f32 %v1384, %v1400
        %v1460 = vmul.f32 %v1387, %v1400
        %v1461 = vmul.f32 %v1390, %v1400
        %v1462 = vmul.f32 %v1393, %v1400
        %v1463 = vmul.f32 %v1396, %v1400
        %v1464 = vmul.f32 %v1399, %v1400
        %v1465 = vsub.f32 %v1080, %v1401
        %v1466 = vsub.f32 %v1081, %v1402
        %v1467 = vsub.f32 %v1082, %v1403
        %v1468 = vsub.f32 %v1083, %v1404
        %v1469 = vsub.f32 %v1084, %v1405
        %v1470 = vsub.f32 %v1085, %v1406
        %v1471 = vsub.f32 %v1086, %v1407
        %v1472 = vsub.f32 %v1087, %v1408
        %v1473 = vsub.f32 %v1088, %v1409
        %v1474 = vsub.f32 %v1089, %v1410
        %v1475 = vsub.f32 %v1090, %v1411
        %v1476 = vsub.f32 %v1091, %v1412
        %v1477 = vsub.f32 %v1092, %v1413
        %v1478 = vsub.f32 %v1093, %v1414
        %v1479 = vsub.f32 %v1094, %v1415
        %v1480 = vsub.f32 %v1095, %v1416
        %v1481 = vsub.f32 %v1112, %v1417
        %v1482 = vsub.f32 %v1113, %v1418
        %v1483 = vsub.f32 %v1114, %v1419
        %v1484 = vsub.f32 %v1115, %v1420
        %v1485 = vsub.f32 %v1116, %v1421
        %v1486 = vsub.f32 %v1117, %v1422
        %v1487 = vsub.f32 %v1118, %v1423
        %v1488 = vsub.f32 %v1119, %v1424
        %v1489 = vsub.f32 %v1120, %v1425
        %v1490 = vsub.f32 %v1121, %v1426
        %v1491 = vsub.f32 %v1122, %v1427
        %v1492 = vsub.f32 %v1123, %v1428
        %v1493 = vsub.f32 %v1124, %v1429
        %v1494 = vsub.f32 %v1125, %v1430
        %v1495 = vsub.f32 %v1126, %v1431
        %v1496 = vsub.f32 %v1127, %v1432
        %v1497 = vsub.f32 %v1160, %v1433
        %v1498 = vsub.f32 %v1161, %v1434
        %v1499 = vsub.f32 %v1162, %v1435
        %v1500 = vsub.f32 %v1163, %v1436
        %v1501 = vsub.f32 %v1164, %v1437
        %v1502 = vsub.f32 %v1165, %v1438
        %v1503 = vsub.f32 %v1166, %v1439
        %v1504 = vsub.f32 %v1167, %v1440
        %v1505 = vsub.f32 %v1168, %v1441
        %v1506 = vsub.f32 %v1169, %v1442
        %v1507 = vsub.f32 %v1170, %v1443
        %v1508 = vsub.f32 %v1171, %v1444
        %v1509 = vsub.f32 %v1172, %v1445
        %v1510 = vsub.f32 %v1173, %v1446
        %v1511 = vsub.f32 %v1174, %v1447
        %v1512 = vsub.f32 %v1175, %v1448
        %v1513 = vsub.f32 %v1192, %v1449
        %v1514 = vsub.f32 %v1193, %v1450
        %v1515 = vsub.f32 %v1194, %v1451
        %v1516 = vsub.f32 %v1195, %v1452
        %v1517 = vsub.f32 %v1196, %v1453
        %v1518 = vsub.f32 %v1197, %v1454
        %v1519 = vsub.f32 %v1198, %v1455
        %v1520 = vsub.f32 %v1199, %v1456
        %v1521 = vsub.f32 %v1200, %v1457
        %v1522 = vsub.f32 %v1201, %v1458
        %v1523 = vsub.f32 %v1202, %v1459
        %v1524 = vsub.f32 %v1203, %v1460
        %v1525 = vsub.f32 %v1204, %v1461
        %v1526 = vsub.f32 %v1205, %v1462
        %v1527 = vsub.f32 %v1206, %v1463
        %v1528 = vsub.f32 %v1207, %v1464
        %v1529 = vmul.f32 %v1465, %v1465
        %v1530 = vmul.f32 %v1466, %v1466
        %v1531 = vmul.f32 %v1467, %v1467
        %v1532 = vmul.f32 %v1468, %v1468
        %v1533 = vmul.f32 %v1469, %v1469
        %v1534 = vmul.f32 %v1470, %v1470
        %v1535 = vmul.f32 %v1471, %v1471
        %v1536 = vmul.f32 %v1472, %v1472
        %v1537 = vmul.f32 %v1473, %v1473
        %v1538 = vmul.f32 %v1474, %v1474
        %v1539 = vmul.f32 %v1475, %v1475
        %v1540 = vmul.f32 %v1476, %v1476
        %v1541 = vmul.f32 %v1477, %v1477
        %v1542 = vmul.f32 %v1478, %v1478
        %v1543 = vmul.f32 %v1479, %v1479
        %v1544 = vmul.f32 %v1480, %v1480
        %v1545 = vmul.f32 %v1481, %v1481
        %v1546 = vmul.f32 %v1482, %v1482
        %v1547 = vmul.f32 %v1483, %v1483
        %v1548 = vmul.f32 %v1484, %v1484
        %v1549 = vmul.f32 %v1485, %v1485
        %v1550 = vmul.f32 %v1486, %v1486
        %v1551 = vmul.f32 %v1487, %v1487
        %v1552 = vmul.f32 %v1488, %v1488
        %v1553 = vmul.f32 %v1489, %v1489
        %v1554 = vmul.f32 %v1490, %v1490
        %v1555 = vmul.f32 %v1491, %v1491
        %v1556 = vmul.f32 %v1492, %v1492
        %v1557 = vmul.f32 %v1493, %v1493
        %v1558 = vmul.f32 %v1494, %v1494
        %v1559 = vmul.f32 %v1495, %v1495
        %v1560 = vmul.f32 %v1496, %v1496
        %v1561 = vmul.f32 %v1497, %v1497
        %v1562 = vmul.f32 %v1498, %v1498
        %v1563 = vmul.f32 %v1499, %v1499
        %v1564 = vmul.f32 %v1500, %v1500
        %v1565 = vmul.f32 %v1501, %v1501
        %v1566 = vmul.f32 %v1502, %v1502
        %v1567 = vmul.f32 %v1503, %v1503
        %v1568 = vmul.f32 %v1504, %v1504
        %v1569 = vmul.f32 %v1505, %v1505
        %v1570 = vmul.f32 %v1506, %v1506
        %v1571 = vmul.f32 %v1507, %v1507
        %v1572 = vmul.f32 %v1508, %v1508
        %v1573 = vmul.f32 %v1509, %v1509
        %v1574 = vmul.f32 %v1510, %v1510
        %v1575 = vmul.f32 %v1511, %v1511
        %v1576 = vmul.f32 %v1512, %v1512
        %v1577 = vmul.f32 %v1513, %v1513
        %v1578 = vmul.f32 %v1514, %v1514
        %v1579 = vmul.f32 %v1515, %v1515
        %v1580 = vmul.f32 %v1516, %v1516
        %v1581 = vmul.f32 %v1517, %v1517
        %v1582 = vmul.f32 %v1518, %v1518
        %v1583 = vmul.f32 %v1519, %v1519
        %v1584 = vmul.f32 %v1520, %v1520
        %v1585 = vmul.f32 %v1521, %v1521
        %v1586 = vmul.f32 %v1522, %v1522
        %v1587 = vmul.f32 %v1523, %v1523
        %v1588 = vmul.f32 %v1524, %v1524
        %v1589 = vmul.f32 %v1525, %v1525
        %v1590 = vmul.f32 %v1526, %v1526
        %v1591 = vmul.f32 %v1527, %v1527
        %v1592 = vmul.f32 %v1528, %v1528
        %v1593 = vsel %vm477, %v1529, 0.0
        %1594 = vadd.xlane.f32.xlu0 %v1593
        %v1595 = vpop.xlane.xlu0 %1594
        %v1596 = vsel %vm477, %v1530, 0.0
        %1597 = vadd.xlane.f32.xlu0 %v1596
        %v1598 = vpop.xlane.xlu0 %1597
        %v1599 = vsel %vm477, %v1531, 0.0
        %1600 = vadd.xlane.f32.xlu0 %v1599
        %v1601 = vpop.xlane.xlu0 %1600
        %v1602 = vsel %vm477, %v1532, 0.0
        %1603 = vadd.xlane.f32.xlu0 %v1602
        %v1604 = vpop.xlane.xlu0 %1603
        %v1605 = vsel %vm477, %v1533, 0.0
        %1606 = vadd.xlane.f32.xlu0 %v1605
        %v1607 = vpop.xlane.xlu0 %1606
        %v1608 = vsel %vm477, %v1534, 0.0
        %1609 = vadd.xlane.f32.xlu0 %v1608
        %v1610 = vpop.xlane.xlu0 %1609
        %v1611 = vsel %vm477, %v1535, 0.0
        %1612 = vadd.xlane.f32.xlu0 %v1611
        %v1613 = vpop.xlane.xlu0 %1612
        %v1614 = vsel %vm477, %v1536, 0.0
        %1615 = vadd.xlane.f32.xlu0 %v1614
        %v1616 = vpop.xlane.xlu0 %1615
        %v1617 = vsel %vm477, %v1537, 0.0
        %1618 = vadd.xlane.f32.xlu0 %v1617
        %v1619 = vpop.xlane.xlu0 %1618
        %v1620 = vsel %vm477, %v1538, 0.0
        %1621 = vadd.xlane.f32.xlu0 %v1620
        %v1622 = vpop.xlane.xlu0 %1621
        %v1623 = vsel %vm477, %v1539, 0.0
        %1624 = vadd.xlane.f32.xlu0 %v1623
        %v1625 = vpop.xlane.xlu0 %1624
        %v1626 = vsel %vm477, %v1540, 0.0
        %1627 = vadd.xlane.f32.xlu0 %v1626
        %v1628 = vpop.xlane.xlu0 %1627
        %v1629 = vsel %vm477, %v1541, 0.0
        %1630 = vadd.xlane.f32.xlu0 %v1629
        %v1631 = vpop.xlane.xlu0 %1630
        %v1632 = vsel %vm477, %v1542, 0.0
        %1633 = vadd.xlane.f32.xlu0 %v1632
        %v1634 = vpop.xlane.xlu0 %1633
        %v1635 = vsel %vm477, %v1543, 0.0
        %1636 = vadd.xlane.f32.xlu0 %v1635
        %v1637 = vpop.xlane.xlu0 %1636
        %v1638 = vsel %vm477, %v1544, 0.0
        %1639 = vadd.xlane.f32.xlu0 %v1638
        %v1640 = vpop.xlane.xlu0 %1639
        %v1641 = vsel %vm477, %v1545, 0.0
        %1642 = vadd.xlane.f32.xlu0 %v1641
        %v1643 = vpop.xlane.xlu0 %1642
        %v1644 = vsel %vm477, %v1546, 0.0
        %1645 = vadd.xlane.f32.xlu0 %v1644
        %v1646 = vpop.xlane.xlu0 %1645
        %v1647 = vsel %vm477, %v1547, 0.0
        %1648 = vadd.xlane.f32.xlu0 %v1647
        %v1649 = vpop.xlane.xlu0 %1648
        %v1650 = vsel %vm477, %v1548, 0.0
        %1651 = vadd.xlane.f32.xlu0 %v1650
        %v1652 = vpop.xlane.xlu0 %1651
        %v1653 = vsel %vm477, %v1549, 0.0
        %1654 = vadd.xlane.f32.xlu0 %v1653
        %v1655 = vpop.xlane.xlu0 %1654
        %v1656 = vsel %vm477, %v1550, 0.0
        %1657 = vadd.xlane.f32.xlu0 %v1656
        %v1658 = vpop.xlane.xlu0 %1657
        %v1659 = vsel %vm477, %v1551, 0.0
        %1660 = vadd.xlane.f32.xlu0 %v1659
        %v1661 = vpop.xlane.xlu0 %1660
        %v1662 = vsel %vm477, %v1552, 0.0
        %1663 = vadd.xlane.f32.xlu0 %v1662
        %v1664 = vpop.xlane.xlu0 %1663
        %v1665 = vsel %vm477, %v1553, 0.0
        %1666 = vadd.xlane.f32.xlu0 %v1665
        %v1667 = vpop.xlane.xlu0 %1666
        %v1668 = vsel %vm477, %v1554, 0.0
        %1669 = vadd.xlane.f32.xlu0 %v1668
        %v1670 = vpop.xlane.xlu0 %1669
        %v1671 = vsel %vm477, %v1555, 0.0
        %1672 = vadd.xlane.f32.xlu0 %v1671
        %v1673 = vpop.xlane.xlu0 %1672
        %v1674 = vsel %vm477, %v1556, 0.0
        %1675 = vadd.xlane.f32.xlu0 %v1674
        %v1676 = vpop.xlane.xlu0 %1675
        %v1677 = vsel %vm477, %v1557, 0.0
        %1678 = vadd.xlane.f32.xlu0 %v1677
        %v1679 = vpop.xlane.xlu0 %1678
        %v1680 = vsel %vm477, %v1558, 0.0
        %1681 = vadd.xlane.f32.xlu0 %v1680
        %v1682 = vpop.xlane.xlu0 %1681
        %v1683 = vsel %vm477, %v1559, 0.0
        %1684 = vadd.xlane.f32.xlu0 %v1683
        %v1685 = vpop.xlane.xlu0 %1684
        %v1686 = vsel %vm477, %v1560, 0.0
        %1687 = vadd.xlane.f32.xlu0 %v1686
        %v1688 = vpop.xlane.xlu0 %1687
        %v1689 = vsel %vm477, %v1561, 0.0
        %1690 = vadd.xlane.f32.xlu0 %v1689
        %v1691 = vpop.xlane.xlu0 %1690
        %v1692 = vsel %vm477, %v1562, 0.0
        %1693 = vadd.xlane.f32.xlu0 %v1692
        %v1694 = vpop.xlane.xlu0 %1693
        %v1695 = vsel %vm477, %v1563, 0.0
        %1696 = vadd.xlane.f32.xlu0 %v1695
        %v1697 = vpop.xlane.xlu0 %1696
        %v1698 = vsel %vm477, %v1564, 0.0
        %1699 = vadd.xlane.f32.xlu0 %v1698
        %v1700 = vpop.xlane.xlu0 %1699
        %v1701 = vsel %vm477, %v1565, 0.0
        %1702 = vadd.xlane.f32.xlu0 %v1701
        %v1703 = vpop.xlane.xlu0 %1702
        %v1704 = vsel %vm477, %v1566, 0.0
        %1705 = vadd.xlane.f32.xlu0 %v1704
        %v1706 = vpop.xlane.xlu0 %1705
        %v1707 = vsel %vm477, %v1567, 0.0
        %1708 = vadd.xlane.f32.xlu0 %v1707
        %v1709 = vpop.xlane.xlu0 %1708
        %v1710 = vsel %vm477, %v1568, 0.0
        %1711 = vadd.xlane.f32.xlu0 %v1710
        %v1712 = vpop.xlane.xlu0 %1711
        %v1713 = vsel %vm477, %v1569, 0.0
        %1714 = vadd.xlane.f32.xlu0 %v1713
        %v1715 = vpop.xlane.xlu0 %1714
        %v1716 = vsel %vm477, %v1570, 0.0
        %1717 = vadd.xlane.f32.xlu0 %v1716
        %v1718 = vpop.xlane.xlu0 %1717
        %v1719 = vsel %vm477, %v1571, 0.0
        %1720 = vadd.xlane.f32.xlu0 %v1719
        %v1721 = vpop.xlane.xlu0 %1720
        %v1722 = vsel %vm477, %v1572, 0.0
        %1723 = vadd.xlane.f32.xlu0 %v1722
        %v1724 = vpop.xlane.xlu0 %1723
        %v1725 = vsel %vm477, %v1573, 0.0
        %1726 = vadd.xlane.f32.xlu0 %v1725
        %v1727 = vpop.xlane.xlu0 %1726
        %v1728 = vsel %vm477, %v1574, 0.0
        %1729 = vadd.xlane.f32.xlu0 %v1728
        %v1730 = vpop.xlane.xlu0 %1729
        %v1731 = vsel %vm477, %v1575, 0.0
        %1732 = vadd.xlane.f32.xlu0 %v1731
        %v1733 = vpop.xlane.xlu0 %1732
        %v1734 = vsel %vm477, %v1576, 0.0
        %1735 = vadd.xlane.f32.xlu0 %v1734
        %v1736 = vpop.xlane.xlu0 %1735
        %v1737 = vsel %vm477, %v1577, 0.0
        %1738 = vadd.xlane.f32.xlu0 %v1737
        %v1739 = vpop.xlane.xlu0 %1738
        %v1740 = vsel %vm477, %v1578, 0.0
        %1741 = vadd.xlane.f32.xlu0 %v1740
        %v1742 = vpop.xlane.xlu0 %1741
        %v1743 = vsel %vm477, %v1579, 0.0
        %1744 = vadd.xlane.f32.xlu0 %v1743
        %v1745 = vpop.xlane.xlu0 %1744
        %v1746 = vsel %vm477, %v1580, 0.0
        %1747 = vadd.xlane.f32.xlu0 %v1746
        %v1748 = vpop.xlane.xlu0 %1747
        %v1749 = vsel %vm477, %v1581, 0.0
        %1750 = vadd.xlane.f32.xlu0 %v1749
        %v1751 = vpop.xlane.xlu0 %1750
        %v1752 = vsel %vm477, %v1582, 0.0
        %1753 = vadd.xlane.f32.xlu0 %v1752
        %v1754 = vpop.xlane.xlu0 %1753
        %v1755 = vsel %vm477, %v1583, 0.0
        %1756 = vadd.xlane.f32.xlu0 %v1755
        %v1757 = vpop.xlane.xlu0 %1756
        %v1758 = vsel %vm477, %v1584, 0.0
        %1759 = vadd.xlane.f32.xlu0 %v1758
        %v1760 = vpop.xlane.xlu0 %1759
        %v1761 = vsel %vm477, %v1585, 0.0
        %1762 = vadd.xlane.f32.xlu0 %v1761
        %v1763 = vpop.xlane.xlu0 %1762
        %v1764 = vsel %vm477, %v1586, 0.0
        %1765 = vadd.xlane.f32.xlu0 %v1764
        %v1766 = vpop.xlane.xlu0 %1765
        %v1767 = vsel %vm477, %v1587, 0.0
        %1768 = vadd.xlane.f32.xlu0 %v1767
        %v1769 = vpop.xlane.xlu0 %1768
        %v1770 = vsel %vm477, %v1588, 0.0
        %1771 = vadd.xlane.f32.xlu0 %v1770
        %v1772 = vpop.xlane.xlu0 %1771
        %v1773 = vsel %vm477, %v1589, 0.0
        %1774 = vadd.xlane.f32.xlu0 %v1773
        %v1775 = vpop.xlane.xlu0 %1774
        %v1776 = vsel %vm477, %v1590, 0.0
        %1777 = vadd.xlane.f32.xlu0 %v1776
        %v1778 = vpop.xlane.xlu0 %1777
        %v1779 = vsel %vm477, %v1591, 0.0
        %1780 = vadd.xlane.f32.xlu0 %v1779
        %v1781 = vpop.xlane.xlu0 %1780
        %v1782 = vsel %vm477, %v1592, 0.0
        %1783 = vadd.xlane.f32.xlu0 %v1782
        %v1784 = vpop.xlane.xlu0 %1783
        %v1785 = vmul.f32 %v1595, %v1400
        %v1786 = vmul.f32 %v1598, %v1400
        %v1787 = vmul.f32 %v1601, %v1400
        %v1788 = vmul.f32 %v1604, %v1400
        %v1789 = vmul.f32 %v1607, %v1400
        %v1790 = vmul.f32 %v1610, %v1400
        %v1791 = vmul.f32 %v1613, %v1400
        %v1792 = vmul.f32 %v1616, %v1400
        %v1793 = vmul.f32 %v1619, %v1400
        %v1794 = vmul.f32 %v1622, %v1400
        %v1795 = vmul.f32 %v1625, %v1400
        %v1796 = vmul.f32 %v1628, %v1400
        %v1797 = vmul.f32 %v1631, %v1400
        %v1798 = vmul.f32 %v1634, %v1400
        %v1799 = vmul.f32 %v1637, %v1400
        %v1800 = vmul.f32 %v1640, %v1400
        %v1801 = vmul.f32 %v1643, %v1400
        %v1802 = vmul.f32 %v1646, %v1400
        %v1803 = vmul.f32 %v1649, %v1400
        %v1804 = vmul.f32 %v1652, %v1400
        %v1805 = vmul.f32 %v1655, %v1400
        %v1806 = vmul.f32 %v1658, %v1400
        %v1807 = vmul.f32 %v1661, %v1400
        %v1808 = vmul.f32 %v1664, %v1400
        %v1809 = vmul.f32 %v1667, %v1400
        %v1810 = vmul.f32 %v1670, %v1400
        %v1811 = vmul.f32 %v1673, %v1400
        %v1812 = vmul.f32 %v1676, %v1400
        %v1813 = vmul.f32 %v1679, %v1400
        %v1814 = vmul.f32 %v1682, %v1400
        %v1815 = vmul.f32 %v1685, %v1400
        %v1816 = vmul.f32 %v1688, %v1400
        %v1817 = vmul.f32 %v1691, %v1400
        %v1818 = vmul.f32 %v1694, %v1400
        %v1819 = vmul.f32 %v1697, %v1400
        %v1820 = vmul.f32 %v1700, %v1400
        %v1821 = vmul.f32 %v1703, %v1400
        %v1822 = vmul.f32 %v1706, %v1400
        %v1823 = vmul.f32 %v1709, %v1400
        %v1824 = vmul.f32 %v1712, %v1400
        %v1825 = vmul.f32 %v1715, %v1400
        %v1826 = vmul.f32 %v1718, %v1400
        %v1827 = vmul.f32 %v1721, %v1400
        %v1828 = vmul.f32 %v1724, %v1400
        %v1829 = vmul.f32 %v1727, %v1400
        %v1830 = vmul.f32 %v1730, %v1400
        %v1831 = vmul.f32 %v1733, %v1400
        %v1832 = vmul.f32 %v1736, %v1400
        %v1833 = vmul.f32 %v1739, %v1400
        %v1834 = vmul.f32 %v1742, %v1400
        %v1835 = vmul.f32 %v1745, %v1400
        %v1836 = vmul.f32 %v1748, %v1400
        %v1837 = vmul.f32 %v1751, %v1400
        %v1838 = vmul.f32 %v1754, %v1400
        %v1839 = vmul.f32 %v1757, %v1400
        %v1840 = vmul.f32 %v1760, %v1400
        %v1841 = vmul.f32 %v1763, %v1400
        %v1842 = vmul.f32 %v1766, %v1400
        %v1843 = vmul.f32 %v1769, %v1400
        %v1844 = vmul.f32 %v1772, %v1400
        %v1845 = vmul.f32 %v1775, %v1400
        %v1846 = vmul.f32 %v1778, %v1400
        %v1847 = vmul.f32 %v1781, %v1400
        %v1848 = vmul.f32 %v1784, %v1400
        %v1849 = vadd.f32 %v1785, 1e-05
        %v1850 = vadd.f32 %v1786, 1e-05
        %v1851 = vadd.f32 %v1787, 1e-05
        %v1852 = vadd.f32 %v1788, 1e-05
        %v1853 = vadd.f32 %v1789, 1e-05
        %v1854 = vadd.f32 %v1790, 1e-05
        %v1855 = vadd.f32 %v1791, 1e-05
        %v1856 = vadd.f32 %v1792, 1e-05
        %v1857 = vadd.f32 %v1793, 1e-05
        %v1858 = vadd.f32 %v1794, 1e-05
        %v1859 = vadd.f32 %v1795, 1e-05
        %v1860 = vadd.f32 %v1796, 1e-05
        %v1861 = vadd.f32 %v1797, 1e-05
        %v1862 = vadd.f32 %v1798, 1e-05
        %v1863 = vadd.f32 %v1799, 1e-05
        %v1864 = vadd.f32 %v1800, 1e-05
        %v1865 = vadd.f32 %v1801, 1e-05
        %v1866 = vadd.f32 %v1802, 1e-05
        %v1867 = vadd.f32 %v1803, 1e-05
        %v1868 = vadd.f32 %v1804, 1e-05
        %v1869 = vadd.f32 %v1805, 1e-05
        %v1870 = vadd.f32 %v1806, 1e-05
        %v1871 = vadd.f32 %v1807, 1e-05
        %v1872 = vadd.f32 %v1808, 1e-05
        %v1873 = vadd.f32 %v1809, 1e-05
        %v1874 = vadd.f32 %v1810, 1e-05
        %v1875 = vadd.f32 %v1811, 1e-05
        %v1876 = vadd.f32 %v1812, 1e-05
        %v1877 = vadd.f32 %v1813, 1e-05
        %v1878 = vadd.f32 %v1814, 1e-05
        %v1879 = vadd.f32 %v1815, 1e-05
        %v1880 = vadd.f32 %v1816, 1e-05
        %v1881 = vadd.f32 %v1817, 1e-05
        %v1882 = vadd.f32 %v1818, 1e-05
        %v1883 = vadd.f32 %v1819, 1e-05
        %v1884 = vadd.f32 %v1820, 1e-05
        %v1885 = vadd.f32 %v1821, 1e-05
        %v1886 = vadd.f32 %v1822, 1e-05
        %v1887 = vadd.f32 %v1823, 1e-05
        %v1888 = vadd.f32 %v1824, 1e-05
        %v1889 = vadd.f32 %v1825, 1e-05
        %v1890 = vadd.f32 %v1826, 1e-05
        %v1891 = vadd.f32 %v1827, 1e-05
        %v1892 = vadd.f32 %v1828, 1e-05
        %v1893 = vadd.f32 %v1829, 1e-05
        %v1894 = vadd.f32 %v1830, 1e-05
        %v1895 = vadd.f32 %v1831, 1e-05
        %v1896 = vadd.f32 %v1832, 1e-05
        %v1897 = vadd.f32 %v1833, 1e-05
        %v1898 = vadd.f32 %v1834, 1e-05
        %v1899 = vadd.f32 %v1835, 1e-05
        %v1900 = vadd.f32 %v1836, 1e-05
        %v1901 = vadd.f32 %v1837, 1e-05
        %v1902 = vadd.f32 %v1838, 1e-05
        %v1903 = vadd.f32 %v1839, 1e-05
        %v1904 = vadd.f32 %v1840, 1e-05
        %v1905 = vadd.f32 %v1841, 1e-05
        %v1906 = vadd.f32 %v1842, 1e-05
        %v1907 = vadd.f32 %v1843, 1e-05
        %v1908 = vadd.f32 %v1844, 1e-05
        %v1909 = vadd.f32 %v1845, 1e-05
        %v1910 = vadd.f32 %v1846, 1e-05
        %v1911 = vadd.f32 %v1847, 1e-05
        %v1912 = vadd.f32 %v1848, 1e-05
        %v1913 = vrsqrt.pop %v1849
        %v1914 = vrsqrt.pop %v1850
        %v1915 = vrsqrt.pop %v1851
        %v1916 = vrsqrt.pop %v1852
        %v1917 = vrsqrt.pop %v1853
        %v1918 = vrsqrt.pop %v1854
        %v1919 = vrsqrt.pop %v1855
        %v1920 = vrsqrt.pop %v1856
        %v1921 = vrsqrt.pop %v1857
        %v1922 = vrsqrt.pop %v1858
        %v1923 = vrsqrt.pop %v1859
        %v1924 = vrsqrt.pop %v1860
        %v1925 = vrsqrt.pop %v1861
        %v1926 = vrsqrt.pop %v1862
        %v1927 = vrsqrt.pop %v1863
        %v1928 = vrsqrt.pop %v1864
        %v1929 = vrsqrt.pop %v1865
        %v1930 = vrsqrt.pop %v1866
        %v1931 = vrsqrt.pop %v1867
        %v1932 = vrsqrt.pop %v1868
        %v1933 = vrsqrt.pop %v1869
        %v1934 = vrsqrt.pop %v1870
        %v1935 = vrsqrt.pop %v1871
        %v1936 = vrsqrt.pop %v1872
        %v1937 = vrsqrt.pop %v1873
        %v1938 = vrsqrt.pop %v1874
        %v1939 = vrsqrt.pop %v1875
        %v1940 = vrsqrt.pop %v1876
        %v1941 = vrsqrt.pop %v1877
        %v1942 = vrsqrt.pop %v1878
        %v1943 = vrsqrt.pop %v1879
        %v1944 = vrsqrt.pop %v1880
        %v1945 = vrsqrt.pop %v1881
        %v1946 = vrsqrt.pop %v1882
        %v1947 = vrsqrt.pop %v1883
        %v1948 = vrsqrt.pop %v1884
        %v1949 = vrsqrt.pop %v1885
        %v1950 = vrsqrt.pop %v1886
        %v1951 = vrsqrt.pop %v1887
        %v1952 = vrsqrt.pop %v1888
        %v1953 = vrsqrt.pop %v1889
        %v1954 = vrsqrt.pop %v1890
        %v1955 = vrsqrt.pop %v1891
        %v1956 = vrsqrt.pop %v1892
        %v1957 = vrsqrt.pop %v1893
        %v1958 = vrsqrt.pop %v1894
        %v1959 = vrsqrt.pop %v1895
        %v1960 = vrsqrt.pop %v1896
        %v1961 = vrsqrt.pop %v1897
        %v1962 = vrsqrt.pop %v1898
        %v1963 = vrsqrt.pop %v1899
        %v1964 = vrsqrt.pop %v1900
        %v1965 = vrsqrt.pop %v1901
        %v1966 = vrsqrt.pop %v1902
        %v1967 = vrsqrt.pop %v1903
        %v1968 = vrsqrt.pop %v1904
        %v1969 = vrsqrt.pop %v1905
        %v1970 = vrsqrt.pop %v1906
        %v1971 = vrsqrt.pop %v1907
        %v1972 = vrsqrt.pop %v1908
        %v1973 = vrsqrt.pop %v1909
        %v1974 = vrsqrt.pop %v1910
        %v1975 = vrsqrt.pop %v1911
        %v1976 = vrsqrt.pop %v1912
        %v1977 = vmul.f32 %v1465, %v1913
        %v1978 = vmul.f32 %v1466, %v1914
        %v1979 = vmul.f32 %v1467, %v1915
        %v1980 = vmul.f32 %v1468, %v1916
        %v1981 = vmul.f32 %v1469, %v1917
        %v1982 = vmul.f32 %v1470, %v1918
        %v1983 = vmul.f32 %v1471, %v1919
        %v1984 = vmul.f32 %v1472, %v1920
        %v1985 = vmul.f32 %v1473, %v1921
        %v1986 = vmul.f32 %v1474, %v1922
        %v1987 = vmul.f32 %v1475, %v1923
        %v1988 = vmul.f32 %v1476, %v1924
        %v1989 = vmul.f32 %v1477, %v1925
        %v1990 = vmul.f32 %v1478, %v1926
        %v1991 = vmul.f32 %v1479, %v1927
        %v1992 = vmul.f32 %v1480, %v1928
        %v1993 = vmul.f32 %v1481, %v1929
        %v1994 = vmul.f32 %v1482, %v1930
        %v1995 = vmul.f32 %v1483, %v1931
        %v1996 = vmul.f32 %v1484, %v1932
        %v1997 = vmul.f32 %v1485, %v1933
        %v1998 = vmul.f32 %v1486, %v1934
        %v1999 = vmul.f32 %v1487, %v1935
        %v2000 = vmul.f32 %v1488, %v1936
        %v2001 = vmul.f32 %v1489, %v1937
        %v2002 = vmul.f32 %v1490, %v1938
        %v2003 = vmul.f32 %v1491, %v1939
        %v2004 = vmul.f32 %v1492, %v1940
        %v2005 = vmul.f32 %v1493, %v1941
        %v2006 = vmul.f32 %v1494, %v1942
        %v2007 = vmul.f32 %v1495, %v1943
        %v2008 = vmul.f32 %v1496, %v1944
        %v2009 = vmul.f32 %v1497, %v1945
        %v2010 = vmul.f32 %v1498, %v1946
        %v2011 = vmul.f32 %v1499, %v1947
        %v2012 = vmul.f32 %v1500, %v1948
        %v2013 = vmul.f32 %v1501, %v1949
        %v2014 = vmul.f32 %v1502, %v1950
        %v2015 = vmul.f32 %v1503, %v1951
        %v2016 = vmul.f32 %v1504, %v1952
        %v2017 = vmul.f32 %v1505, %v1953
        %v2018 = vmul.f32 %v1506, %v1954
        %v2019 = vmul.f32 %v1507, %v1955
        %v2020 = vmul.f32 %v1508, %v1956
        %v2021 = vmul.f32 %v1509, %v1957
        %v2022 = vmul.f32 %v1510, %v1958
        %v2023 = vmul.f32 %v1511, %v1959
        %v2024 = vmul.f32 %v1512, %v1960
        %v2025 = vmul.f32 %v1513, %v1961
        %v2026 = vmul.f32 %v1514, %v1962
        %v2027 = vmul.f32 %v1515, %v1963
        %v2028 = vmul.f32 %v1516, %v1964
        %v2029 = vmul.f32 %v1517, %v1965
        %v2030 = vmul.f32 %v1518, %v1966
        %v2031 = vmul.f32 %v1519, %v1967
        %v2032 = vmul.f32 %v1520, %v1968
        %v2033 = vmul.f32 %v1521, %v1969
        %v2034 = vmul.f32 %v1522, %v1970
        %v2035 = vmul.f32 %v1523, %v1971
        %v2036 = vmul.f32 %v1524, %v1972
        %v2037 = vmul.f32 %v1525, %v1973
        %v2038 = vmul.f32 %v1526, %v1974
        %v2039 = vmul.f32 %v1527, %v1975
        %v2040 = vmul.f32 %v1528, %v1976
        %v2041 = vld [vmem:[%s5] sm:$0x1]
        %v2043 = vlaneseq
        %v2044 = vshrl.u32 %v2043, 7
        %v2045 = vsub.s32 0, %v2044
        %v2046 = vrot.slane %v2041, %v2045
        %v2048 = vmul.f32 %v1977, %v2046
        %v2049 = vmul.f32 %v1978, %v2046
        %v2050 = vmul.f32 %v1979, %v2046
        %v2051 = vmul.f32 %v1980, %v2046
        %v2052 = vmul.f32 %v1981, %v2046
        %v2053 = vmul.f32 %v1982, %v2046
        %v2054 = vmul.f32 %v1983, %v2046
        %v2055 = vmul.f32 %v1984, %v2046
        %v2056 = vmul.f32 %v1985, %v2046
        %v2057 = vmul.f32 %v1986, %v2046
        %v2058 = vmul.f32 %v1987, %v2046
        %v2059 = vmul.f32 %v1988, %v2046
        %v2060 = vmul.f32 %v1989, %v2046
        %v2061 = vmul.f32 %v1990, %v2046
        %v2062 = vmul.f32 %v1991, %v2046
        %v2063 = vmul.f32 %v1992, %v2046
        %v2064 = vmul.f32 %v1993, %v2046
        %v2065 = vmul.f32 %v1994, %v2046
        %v2066 = vmul.f32 %v1995, %v2046
        %v2067 = vmul.f32 %v1996, %v2046
        %v2068 = vmul.f32 %v1997, %v2046
        %v2069 = vmul.f32 %v1998, %v2046
        %v2070 = vmul.f32 %v1999, %v2046
        %v2071 = vmul.f32 %v2000, %v2046
        %v2072 = vmul.f32 %v2001, %v2046
        %v2073 = vmul.f32 %v2002, %v2046
        %v2074 = vmul.f32 %v2003, %v2046
        %v2075 = vmul.f32 %v2004, %v2046
        %v2076 = vmul.f32 %v2005, %v2046
        %v2077 = vmul.f32 %v2006, %v2046
        %v2078 = vmul.f32 %v2007, %v2046
        %v2079 = vmul.f32 %v2008, %v2046
        %v2080 = vmul.f32 %v2009, %v2046
        %v2081 = vmul.f32 %v2010, %v2046
        %v2082 = vmul.f32 %v2011, %v2046
        %v2083 = vmul.f32 %v2012, %v2046
        %v2084 = vmul.f32 %v2013, %v2046
        %v2085 = vmul.f32 %v2014, %v2046
        %v2086 = vmul.f32 %v2015, %v2046
        %v2087 = vmul.f32 %v2016, %v2046
        %v2088 = vmul.f32 %v2017, %v2046
        %v2089 = vmul.f32 %v2018, %v2046
        %v2090 = vmul.f32 %v2019, %v2046
        %v2091 = vmul.f32 %v2020, %v2046
        %v2092 = vmul.f32 %v2021, %v2046
        %v2093 = vmul.f32 %v2022, %v2046
        %v2094 = vmul.f32 %v2023, %v2046
        %v2095 = vmul.f32 %v2024, %v2046
        %v2096 = vmul.f32 %v2025, %v2046
        %v2097 = vmul.f32 %v2026, %v2046
        %v2098 = vmul.f32 %v2027, %v2046
        %v2099 = vmul.f32 %v2028, %v2046
        %v2100 = vmul.f32 %v2029, %v2046
        %v2101 = vmul.f32 %v2030, %v2046
        %v2102 = vmul.f32 %v2031, %v2046
        %v2103 = vmul.f32 %v2032, %v2046
        %v2104 = vmul.f32 %v2033, %v2046
        %v2105 = vmul.f32 %v2034, %v2046
        %v2106 = vmul.f32 %v2035, %v2046
        %v2107 = vmul.f32 %v2036, %v2046
        %v2108 = vmul.f32 %v2037, %v2046
        %v2109 = vmul.f32 %v2038, %v2046
        %v2110 = vmul.f32 %v2039, %v2046
        %v2111 = vmul.f32 %v2040, %v2046
        %v2112 = vld [vmem:[%s6] sm:$0x1]
        %v2114 = vlaneseq
        %v2115 = vshrl.u32 %v2114, 7
        %v2116 = vsub.s32 0, %v2115
        %v2117 = vrot.slane %v2112, %v2116
        %v2119 = vadd.f32 %v2048, %v2117
        %v2120 = vadd.f32 %v2049, %v2117
        %v2121 = vadd.f32 %v2050, %v2117
        %v2122 = vadd.f32 %v2051, %v2117
        %v2123 = vadd.f32 %v2052, %v2117
        %v2124 = vadd.f32 %v2053, %v2117
        %v2125 = vadd.f32 %v2054, %v2117
        %v2126 = vadd.f32 %v2055, %v2117
        %v2127 = vadd.f32 %v2056, %v2117
        %v2128 = vadd.f32 %v2057, %v2117
        %v2129 = vadd.f32 %v2058, %v2117
        %v2130 = vadd.f32 %v2059, %v2117
        %v2131 = vadd.f32 %v2060, %v2117
        %v2132 = vadd.f32 %v2061, %v2117
        %v2133 = vadd.f32 %v2062, %v2117
        %v2134 = vadd.f32 %v2063, %v2117
        %v2135 = vadd.f32 %v2064, %v2117
        %v2136 = vadd.f32 %v2065, %v2117
        %v2137 = vadd.f32 %v2066, %v2117
        %v2138 = vadd.f32 %v2067, %v2117
        %v2139 = vadd.f32 %v2068, %v2117
        %v2140 = vadd.f32 %v2069, %v2117
        %v2141 = vadd.f32 %v2070, %v2117
        %v2142 = vadd.f32 %v2071, %v2117
        %v2143 = vadd.f32 %v2072, %v2117
        %v2144 = vadd.f32 %v2073, %v2117
        %v2145 = vadd.f32 %v2074, %v2117
        %v2146 = vadd.f32 %v2075, %v2117
        %v2147 = vadd.f32 %v2076, %v2117
        %v2148 = vadd.f32 %v2077, %v2117
        %v2149 = vadd.f32 %v2078, %v2117
        %v2150 = vadd.f32 %v2079, %v2117
        %v2151 = vadd.f32 %v2080, %v2117
        %v2152 = vadd.f32 %v2081, %v2117
        %v2153 = vadd.f32 %v2082, %v2117
        %v2154 = vadd.f32 %v2083, %v2117
        %v2155 = vadd.f32 %v2084, %v2117
        %v2156 = vadd.f32 %v2085, %v2117
        %v2157 = vadd.f32 %v2086, %v2117
        %v2158 = vadd.f32 %v2087, %v2117
        %v2159 = vadd.f32 %v2088, %v2117
        %v2160 = vadd.f32 %v2089, %v2117
        %v2161 = vadd.f32 %v2090, %v2117
        %v2162 = vadd.f32 %v2091, %v2117
        %v2163 = vadd.f32 %v2092, %v2117
        %v2164 = vadd.f32 %v2093, %v2117
        %v2165 = vadd.f32 %v2094, %v2117
        %v2166 = vadd.f32 %v2095, %v2117
        %v2167 = vadd.f32 %v2096, %v2117
        %v2168 = vadd.f32 %v2097, %v2117
        %v2169 = vadd.f32 %v2098, %v2117
        %v2170 = vadd.f32 %v2099, %v2117
        %v2171 = vadd.f32 %v2100, %v2117
        %v2172 = vadd.f32 %v2101, %v2117
        %v2173 = vadd.f32 %v2102, %v2117
        %v2174 = vadd.f32 %v2103, %v2117
        %v2175 = vadd.f32 %v2104, %v2117
        %v2176 = vadd.f32 %v2105, %v2117
        %v2177 = vadd.f32 %v2106, %v2117
        %v2178 = vadd.f32 %v2107, %v2117
        %v2179 = vadd.f32 %v2108, %v2117
        %v2180 = vadd.f32 %v2109, %v2117
        %v2181 = vadd.f32 %v2110, %v2117
        %v2182 = vadd.f32 %v2111, %v2117
        %2199 = vrot.lane.b32.xlu0 %v2135, 32
        %v2200 = vpop.permute.xlu0 %2199
        %2201 = vrot.lane.b32.xlu0 %v2136, 32
        %v2202 = vpop.permute.xlu0 %2201
        %2203 = vrot.lane.b32.xlu0 %v2137, 32
        %v2204 = vpop.permute.xlu0 %2203
        %2205 = vrot.lane.b32.xlu0 %v2138, 32
        %v2206 = vpop.permute.xlu0 %2205
        %2207 = vrot.lane.b32.xlu0 %v2139, 32
        %v2208 = vpop.permute.xlu0 %2207
        %2209 = vrot.lane.b32.xlu0 %v2140, 32
        %v2210 = vpop.permute.xlu0 %2209
        %2211 = vrot.lane.b32.xlu0 %v2141, 32
        %v2212 = vpop.permute.xlu0 %2211
        %2213 = vrot.lane.b32.xlu0 %v2142, 32
        %v2214 = vpop.permute.xlu0 %2213
        %2215 = vrot.lane.b32.xlu0 %v2143, 32
        %v2216 = vpop.permute.xlu0 %2215
        %2217 = vrot.lane.b32.xlu0 %v2144, 32
        %v2218 = vpop.permute.xlu0 %2217
        %2219 = vrot.lane.b32.xlu0 %v2145, 32
        %v2220 = vpop.permute.xlu0 %2219
        %2221 = vrot.lane.b32.xlu0 %v2146, 32
        %v2222 = vpop.permute.xlu0 %2221
        %2223 = vrot.lane.b32.xlu0 %v2147, 32
        %v2224 = vpop.permute.xlu0 %2223
        %2225 = vrot.lane.b32.xlu0 %v2148, 32
        %v2226 = vpop.permute.xlu0 %2225
        %2227 = vrot.lane.b32.xlu0 %v2149, 32
        %v2228 = vpop.permute.xlu0 %2227
        %2229 = vrot.lane.b32.xlu0 %v2150, 32
        %v2230 = vpop.permute.xlu0 %2229
        %2263 = vrot.lane.b32.xlu0 %v2151, 64
        %v2264 = vpop.permute.xlu0 %2263
        %2265 = vrot.lane.b32.xlu0 %v2152, 64
        %v2266 = vpop.permute.xlu0 %2265
        %2267 = vrot.lane.b32.xlu0 %v2153, 64
        %v2268 = vpop.permute.xlu0 %2267
        %2269 = vrot.lane.b32.xlu0 %v2154, 64
        %v2270 = vpop.permute.xlu0 %2269
        %2271 = vrot.lane.b32.xlu0 %v2155, 64
        %v2272 = vpop.permute.xlu0 %2271
        %2273 = vrot.lane.b32.xlu0 %v2156, 64
        %v2274 = vpop.permute.xlu0 %2273
        %2275 = vrot.lane.b32.xlu0 %v2157, 64
        %v2276 = vpop.permute.xlu0 %2275
        %2277 = vrot.lane.b32.xlu0 %v2158, 64
        %v2278 = vpop.permute.xlu0 %2277
        %2279 = vrot.lane.b32.xlu0 %v2159, 64
        %v2280 = vpop.permute.xlu0 %2279
        %2281 = vrot.lane.b32.xlu0 %v2160, 64
        %v2282 = vpop.permute.xlu0 %2281
        %2283 = vrot.lane.b32.xlu0 %v2161, 64
        %v2284 = vpop.permute.xlu0 %2283
        %2285 = vrot.lane.b32.xlu0 %v2162, 64
        %v2286 = vpop.permute.xlu0 %2285
        %2287 = vrot.lane.b32.xlu0 %v2163, 64
        %v2288 = vpop.permute.xlu0 %2287
        %2289 = vrot.lane.b32.xlu0 %v2164, 64
        %v2290 = vpop.permute.xlu0 %2289
        %2291 = vrot.lane.b32.xlu0 %v2165, 64
        %v2292 = vpop.permute.xlu0 %2291
        %2293 = vrot.lane.b32.xlu0 %v2166, 64
        %v2294 = vpop.permute.xlu0 %2293
        %2327 = vrot.lane.b32.xlu0 %v2167, 96
        %v2328 = vpop.permute.xlu0 %2327
        %2329 = vrot.lane.b32.xlu0 %v2168, 96
        %v2330 = vpop.permute.xlu0 %2329
        %2331 = vrot.lane.b32.xlu0 %v2169, 96
        %v2332 = vpop.permute.xlu0 %2331
        %2333 = vrot.lane.b32.xlu0 %v2170, 96
        %v2334 = vpop.permute.xlu0 %2333
        %2335 = vrot.lane.b32.xlu0 %v2171, 96
        %v2336 = vpop.permute.xlu0 %2335
        %2337 = vrot.lane.b32.xlu0 %v2172, 96
        %v2338 = vpop.permute.xlu0 %2337
        %2339 = vrot.lane.b32.xlu0 %v2173, 96
        %v2340 = vpop.permute.xlu0 %2339
        %2341 = vrot.lane.b32.xlu0 %v2174, 96
        %v2342 = vpop.permute.xlu0 %2341
        %2343 = vrot.lane.b32.xlu0 %v2175, 96
        %v2344 = vpop.permute.xlu0 %2343
        %2345 = vrot.lane.b32.xlu0 %v2176, 96
        %v2346 = vpop.permute.xlu0 %2345
        %2347 = vrot.lane.b32.xlu0 %v2177, 96
        %v2348 = vpop.permute.xlu0 %2347
        %2349 = vrot.lane.b32.xlu0 %v2178, 96
        %v2350 = vpop.permute.xlu0 %2349
        %2351 = vrot.lane.b32.xlu0 %v2179, 96
        %v2352 = vpop.permute.xlu0 %2351
        %2353 = vrot.lane.b32.xlu0 %v2180, 96
        %v2354 = vpop.permute.xlu0 %2353
        %2355 = vrot.lane.b32.xlu0 %v2181, 96
        %v2356 = vpop.permute.xlu0 %2355
        %2357 = vrot.lane.b32.xlu0 %v2182, 96
        %v2358 = vpop.permute.xlu0 %2357
        %v2375 = vsel %vm477, %v2119, %v2200
        %v2376 = vsel %vm477, %v2120, %v2202
        %v2377 = vsel %vm477, %v2121, %v2204
        %v2378 = vsel %vm477, %v2122, %v2206
        %v2379 = vsel %vm477, %v2123, %v2208
        %v2380 = vsel %vm477, %v2124, %v2210
        %v2381 = vsel %vm477, %v2125, %v2212
        %v2382 = vsel %vm477, %v2126, %v2214
        %v2383 = vsel %vm477, %v2127, %v2216
        %v2384 = vsel %vm477, %v2128, %v2218
        %v2385 = vsel %vm477, %v2129, %v2220
        %v2386 = vsel %vm477, %v2130, %v2222
        %v2387 = vsel %vm477, %v2131, %v2224
        %v2388 = vsel %vm477, %v2132, %v2226
        %v2389 = vsel %vm477, %v2133, %v2228
        %v2390 = vsel %vm477, %v2134, %v2230
        %vm2391 = vcmask 523264
        %v2392 = vsel %vm2391, %v2375, %v2264
        %v2393 = vsel %vm2391, %v2376, %v2266
        %v2394 = vsel %vm2391, %v2377, %v2268
        %v2395 = vsel %vm2391, %v2378, %v2270
        %v2396 = vsel %vm2391, %v2379, %v2272
        %v2397 = vsel %vm2391, %v2380, %v2274
        %v2398 = vsel %vm2391, %v2381, %v2276
        %v2399 = vsel %vm2391, %v2382, %v2278
        %v2400 = vsel %vm2391, %v2383, %v2280
        %v2401 = vsel %vm2391, %v2384, %v2282
        %v2402 = vsel %vm2391, %v2385, %v2284
        %v2403 = vsel %vm2391, %v2386, %v2286
        %v2404 = vsel %vm2391, %v2387, %v2288
        %v2405 = vsel %vm2391, %v2388, %v2290
        %v2406 = vsel %vm2391, %v2389, %v2292
        %v2407 = vsel %vm2391, %v2390, %v2294
        %vm2408 = vcmask 785408
        %v2409 = vsel %vm2408, %v2392, %v2328
        %v2410 = vsel %vm2408, %v2393, %v2330
        %v2411 = vsel %vm2408, %v2394, %v2332
        %v2412 = vsel %vm2408, %v2395, %v2334
        %v2413 = vsel %vm2408, %v2396, %v2336
        %v2414 = vsel %vm2408, %v2397, %v2338
        %v2415 = vsel %vm2408, %v2398, %v2340
        %v2416 = vsel %vm2408, %v2399, %v2342
        %v2417 = vsel %vm2408, %v2400, %v2344
        %v2418 = vsel %vm2408, %v2401, %v2346
        %v2419 = vsel %vm2408, %v2402, %v2348
        %v2420 = vsel %vm2408, %v2403, %v2350
        %v2421 = vsel %vm2408, %v2404, %v2352
        %v2422 = vsel %vm2408, %v2405, %v2354
        %v2423 = vsel %vm2408, %v2406, %v2356
        %v2424 = vsel %vm2408, %v2407, %v2358
        %2425 = vst [vmem:[%s465] sm:$0xff] %v2409
        %2426 = vst [vmem:[%s465 + $0x8] sm:$0xff] %v2410
        %2427 = vst [vmem:[%s465 + $0x10] sm:$0xff] %v2411
        %2428 = vst [vmem:[%s465 + $0x18] sm:$0xff] %v2412
        %2429 = vst [vmem:[%s465 + $0x20] sm:$0xff] %v2413
        %2430 = vst [vmem:[%s465 + $0x28] sm:$0xff] %v2414
        %2431 = vst [vmem:[%s465 + $0x30] sm:$0xff] %v2415
        %2432 = vst [vmem:[%s465 + $0x38] sm:$0xff] %v2416
        %2433 = vst [vmem:[%s465 + $0x40] sm:$0xff] %v2417
        %2434 = vst [vmem:[%s465 + $0x48] sm:$0xff] %v2418
        %2435 = vst [vmem:[%s465 + $0x50] sm:$0xff] %v2419
        %2436 = vst [vmem:[%s465 + $0x58] sm:$0xff] %v2420
        %2437 = vst [vmem:[%s465 + $0x60] sm:$0xff] %v2421
        %2438 = vst [vmem:[%s465 + $0x68] sm:$0xff] %v2422
        %2439 = vst [vmem:[%s465 + $0x70] sm:$0xff] %v2423
        %2440 = vst [vmem:[%s465 + $0x78] sm:$0xff] %v2424
        %s2441 = smul.u32 16, %s30
        %p2442 = scmp.lt.s32.totalorder %s29, 1
        %s2443 = scalar_select %p2442, %s29, 1
        %p2444 = scmp.lt.s32.totalorder %s2441, 63
        %s2445 = scalar_select %p2444, %s2441, 63
        %s2446 = smul.addr %s2443, 64
        %s2447 = sadd.s32 %s2445, %s2446
        %s2448 = smul.addr %s2447, 8
        %s2449 = scalar_lea.vmem %s7, %s2448
        // Predicated region
        $region69: #{final_upsample_x4.1} parent=47 // pred_check
          %p2450 = pneg %p241
        $region70: #{final_upsample_x4.1} parent=47 // pred_check_branch
          %2452 = sbr.rel (%p2450) target = $region72
        $region71: #{final_upsample_x4.1} parent=47 // pred_region
          %s2453 = smul.u32 16, %s30
        $region72: #{final_upsample_x4.1} parent=47 // pred_fallthru
          _
      $region48: #{final_upsample_x4.1} parent=5 // pred_fallthru
        _
      %p2454 = scmp.le.s32.totalorder 2, %s20
      // Predicated region
      $region73: #{final_upsample_x4.1} parent=5 // pred_check
        %p2455 = pneg %p2454
      $region74: #{final_upsample_x4.1} parent=5 // pred_check_branch
        %2457 = sbr.rel (%p2455) target = $region76
      $region75: #{final_upsample_x4.1} parent=5 // pred_region
        %s2458 = ssub.s32 %s20, 2
        // Predicated region
        $region77: #{final_upsample_x4.1} parent=75 // pred_check
          %p2459 = pneg %p247
        $region78: #{final_upsample_x4.1} parent=75 // pred_check_branch
          %2461 = sbr.rel (%p2459) target = $region80
        $region79: #{final_upsample_x4.1} parent=75 // pred_region
          %s2462 = smul.u32 16, %s32
          %p2463 = scmp.lt.s32.totalorder %s31, 1
          %s2464 = scalar_select %p2463, %s31, 1
          %p2465 = scmp.lt.s32.totalorder %s2462, 63
          %s2466 = scalar_select %p2465, %s2462, 63
          %s2467 = smul.addr %s2464, 64
          %s2468 = sadd.s32 %s2466, %s2467
          %s2469 = smul.addr %s2468, 8
          %s2470 = scalar_lea.vmem %s7, %s2469
        $region80: #{final_upsample_x4.1} parent=75 // pred_fallthru
          _
      $region76: #{final_upsample_x4.1} parent=5 // pred_fallthru
        _
    $region6: #{final_upsample_x4.1} parent=1 // loop_footer
      %s24 = sadd.s32 1, %s20
    $region7: #{final_upsample_x4.1} parent=1 // loop_footer_branch
      %19 = sbr.rel target = $region3
    $region8: #{final_upsample_x4.1} parent=1 // loop_exit
      _
    %2471 = vsyncpa [#allocation3], 1
    %s2472 = scalar_lea.sflag [#allocation3], 1
    %2473 = vsyncpa %s2472, 1
    %2474 = vsyncpa [#allocation5], 1
    %s2475 = scalar_lea.sflag [#allocation5], 1
    %2476 = vsyncpa %s2475, 1
    %2477 = vsyncpa [#allocation8], 1

</llo_original>
